<compile_context>
chip_gen: v7x
topology: tpu7x:2x2x1
jax: 0.10.0
libtpu: 0.0.40
codegen_flags: <defaults>
</compile_context>

<pallas_src>
import jax
import jax.numpy as jnp
from jax.experimental import pallas as pl
from jax.experimental.pallas import tpu as pltpu

PATCH = 16
PATCH_D = 24                 # pretrained pos-embed grid side (384/16)
EMBED_DIM = 32               # scaled-down hidden (real vit_base: 768)
NUM_HEADS = 2
HEAD_DIM = EMBED_DIM // NUM_HEADS
MLP_DIM = 4 * EMBED_DIM
DEPTH = 12
STAGES = (2, 5, 8, 11)
LN_EPS = 1e-6


# ----------------------------- in-kernel helpers ---------------------------- #

def _layernorm(x, gamma, beta):
    # centered variance (avoids E[x^2]-E[x]^2 cancellation); all stats in f32
    mu = jnp.mean(x, axis=-1, keepdims=True)
    xc = x - mu
    var = jnp.mean(xc * xc, axis=-1, keepdims=True)
    return xc * jax.lax.rsqrt(var + LN_EPS) * gamma + beta


def _gelu_tanh(x):
    # TODO(synk): timm ViT uses exact erf-GELU; erf has no Pallas TPU lowering,
    # so the standard tanh approximation is used (max abs error ~3e-3).
    return 0.5 * x * (1.0 + jnp.tanh(0.7978845608028654 * (x + 0.044715 * x * x * x)))


def _bf16(x):
    return x.astype(jnp.bfloat16)


# ------------------------------ fused ViT kernel ---------------------------- #

def _vit_fused_kernel(p_ref, pw_ref, pb_ref, cls_ref, pos_ref,
                      g1_ref, be1_ref, qkvw_ref, qkvb_ref, ow_ref, ob_ref,
                      g2_ref, be2_ref, w1_ref, fb1_ref, w2_ref, fb2_ref,
                      out_ref, x_ref):
    """grid = (batch_tiles, DEPTH); one grid step = one transformer block on a
    whole batch tile.  x_ref (VMEM scratch) carries the activations across the
    depth axis; per-layer weights are streamed per step by Pallas."""
    d = pl.program_id(1)
    D, NH, HD = EMBED_DIM, NUM_HEADS, HEAD_DIM
    T = pos_ref.shape[0]
    Tp = T - 1
    BT_T = x_ref.shape[0]          # batch_tile * T rows
    B = BT_T // T                  # batch elements in this tile (static)
    scale = HD ** -0.5

    # ---- patch embed (Conv2d k=16 s=16 as one bf16 MXU matmul) + cls + pos ----
    @pl.when(d == 0)
    def _():
        emb = jnp.dot(p_ref[...], pw_ref[...],
                      preferred_element_type=jnp.float32) + pb_ref[...]
        cls_row = cls_ref[...] + pos_ref[0:1, :]          # (1, D)
        grid_pos = pos_ref[1:T, :]                        # (Tp, D)
        rows = []
        for b in range(B):
            rows.append(cls_row)
            rows.append(emb[b * Tp:(b + 1) * Tp, :] + grid_pos)
        x_ref[...] = jnp.concatenate(rows, axis=0)        # (B*T, D)

    x = x_ref[...]                                        # (B*T, D) f32

    # ---------------- attention ----------------
    h = _layernorm(x, g1_ref[0], be1_ref[0])
    qkv = jnp.dot(_bf16(h), qkvw_ref[0],
                  preferred_element_type=jnp.float32) + qkvb_ref[0]   # (B*T, 3D)
    q = qkv[:, 0 * D:1 * D]
    k = qkv[:, 1 * D:2 * D]
    v = qkv[:, 2 * D:3 * D]

    attn_rows = []
    for b in range(B):                                    # static, tiny
        rs = slice(b * T, (b + 1) * T)
        qb, kb, vb = q[rs], k[rs], v[rs]
        heads = []
        for hh in range(NH):                              # static, tiny
            cs = slice(hh * HD, (hh + 1) * HD)
            s = jax.lax.dot_general(_bf16(qb[:, cs] * scale), _bf16(kb[:, cs]),
                                    (((1,), (1,)), ((), ())),
                                    preferred_element_type=jnp.float32)  # (T, T)
            s = s - jnp.max(s, axis=-1, keepdims=True)
            p = jnp.exp(s)
            p = p * pl.reciprocal(jnp.sum(p, axis=-1, keepdims=True), approx=True)
            heads.append(jnp.dot(_bf16(p), _bf16(vb[:, cs]),
                                 preferred_element_type=jnp.float32))    # (T, HD)
        attn_rows.append(jnp.concatenate(heads, axis=1))  # (T, D) — no masked stores
    attn = jnp.concatenate(attn_rows, axis=0)             # (B*T, D)

    attn = jnp.dot(_bf16(attn), ow_ref[0],
                   preferred_element_type=jnp.float32) + ob_ref[0]
    x = x + attn

    # ---------------- MLP ----------------
    h2 = _layernorm(x, g2_ref[0], be2_ref[0])
    m = jnp.dot(_bf16(h2), w1_ref[0],
                preferred_element_type=jnp.float32) + fb1_ref[0]
    m = _gelu_tanh(m)
    m = jnp.dot(_bf16(m), w2_ref[0],
                preferred_element_type=jnp.float32) + fb2_ref[0]
    x = x + m

    x_ref[...] = x

    # stacked stage output (4, B*T, D); block is resident across the depth axis
    for i, sd in enumerate(STAGES):
        @pl.when(d == sd)
        def _(i=i):
            out_ref[i] = x


def vit_forward_fused(patches, w_flat, proj_b, cls_tok, pos, blocks,
                      *, batch_tile=None):
    """patches: (B*Tp, K) bf16; returns stacked stage features (4, B*T, D) f32."""
    BTp, K = patches.shape
    T = pos.shape[0]
    Tp = T - 1
    B = BTp // Tp
    D = EMBED_DIM
    if batch_tile is None:
        # fold the batch into the matmul M dim; split in two tiles when B is
        # large enough so v7x's two TensorCores both get work.
        batch_tile = B // 2 if (B >= 4 and B % 2 == 0) else B
    assert B % batch_tile == 0
    nb = B // batch_tile
    bt = batch_tile

    def const_spec(shape):
        nd = len(shape)
        return pl.BlockSpec(shape, lambda i, d, _n=nd: (0,) * _n)

    def layer_spec(shape):      # per-layer streamed weight block
        nd = len(shape)
        return pl.BlockSpec((1,) + shape, lambda i, d, _n=nd: (d,) + (0,) * _n)

    in_specs = [
        pl.BlockSpec((bt * Tp, K), lambda i, d: (i, 0)),        # patches (per tile)
        const_spec((K, D)), const_spec((1, D)),                 # patch-embed w / b
        const_spec((1, D)), const_spec((T, D)),                 # cls token, pos embed
        layer_spec((1, D)), layer_spec((1, D)),                 # ln1 gamma/beta
        layer_spec((D, 3 * D)), layer_spec((1, 3 * D)),         # qkv w/b
        layer_spec((D, D)), layer_spec((1, D)),                 # attn proj w/b
        layer_spec((1, D)), layer_spec((1, D)),                 # ln2 gamma/beta
        layer_spec((D, MLP_DIM)), layer_spec((1, MLP_DIM)),     # fc1 w/b
        layer_spec((MLP_DIM, D)), layer_spec((1, D)),           # fc2 w/b
    ]
    out_shape = jax.ShapeDtypeStruct((len(STAGES), B * T, D), jnp.float32)
    out_spec = pl.BlockSpec((len(STAGES), bt * T, D), lambda i, d: (0, i, 0))

    return pl.pallas_call(
        _vit_fused_kernel,
        out_shape=out_shape,
        grid=(nb, DEPTH),
        in_specs=in_specs,
        out_specs=out_spec,
        scratch_shapes=[pltpu.VMEM((bt * T, D), jnp.float32)],
        compiler_params=pltpu.CompilerParams(
            dimension_semantics=("parallel", "arbitrary")),
    )(patches, w_flat, proj_b, cls_tok, pos,
      blocks["ln1_g"], blocks["ln1_b"], blocks["qkv_w"], blocks["qkv_b"],
      blocks["proj_w"], blocks["proj_b"], blocks["ln2_g"], blocks["ln2_b"],
      blocks["fc1_w"], blocks["fc1_b"], blocks["fc2_w"], blocks["fc2_b"])


# ------------------------------ plain-JAX glue ------------------------------ #

def _bilinear_upsample_align_corners(x, out_h, out_w):
    """x: (1, D, H, W) -> (1, D, out_h, out_w); matches nn.Upsample(bilinear, align_corners=True)."""
    _, _, H, W = x.shape
    ys = jnp.arange(out_h) * ((H - 1) / (out_h - 1)) if out_h > 1 else jnp.zeros((out_h,))
    xs = jnp.arange(out_w) * ((W - 1) / (out_w - 1)) if out_w > 1 else jnp.zeros((out_w,))
    y0 = jnp.floor(ys).astype(jnp.int32)
    x0 = jnp.floor(xs).astype(jnp.int32)
    y1 = jnp.minimum(y0 + 1, H - 1)
    x1 = jnp.minimum(x0 + 1, W - 1)
    wy = (ys - y0)[:, None]
    wx = (xs - x0)[None, :]
    yy0, yy1 = y0[:, None], y1[:, None]
    xx0, xx1 = x0[None, :], x1[None, :]
    v00 = x[:, :, yy0, xx0]
    v01 = x[:, :, yy0, xx1]
    v10 = x[:, :, yy1, xx0]
    v11 = x[:, :, yy1, xx1]
    return (v00 * (1 - wy) * (1 - wx) + v01 * (1 - wy) * wx
            + v10 * wy * (1 - wx) + v11 * wy * wx)


def init_params(key):
    """Parameters kept in the PyTorch (out_features, in_features) convention."""
    D = EMBED_DIM
    keys = jax.random.split(key, 12)
    return {
        "proj_w": 0.02 * jax.random.normal(keys[0], (D, 3, PATCH, PATCH), jnp.float32),
        "proj_b": 0.01 * jax.random.normal(keys[1], (D,), jnp.float32),
        "cls_token": 0.02 * jax.random.normal(keys[2], (1, 1, D), jnp.float32),
        "pos_embed": 0.02 * jax.random.normal(keys[3], (1, 1 + PATCH_D ** 2, D), jnp.float32),
        "blocks": {
            "ln1_g": jnp.ones((DEPTH, 1, D), jnp.float32),
            "ln1_b": jnp.zeros((DEPTH, 1, D), jnp.float32),
            "qkv_w": 0.02 * jax.random.normal(keys[4], (DEPTH, 3 * D, D), jnp.float32),
            "qkv_b": 0.01 * jax.random.normal(keys[5], (DEPTH, 1, 3 * D), jnp.float32),
            "proj_w": 0.02 * jax.random.normal(keys[6], (DEPTH, D, D), jnp.float32),
            "proj_b": 0.01 * jax.random.normal(keys[7], (DEPTH, 1, D), jnp.float32),
            "ln2_g": jnp.ones((DEPTH, 1, D), jnp.float32),
            "ln2_b": jnp.zeros((DEPTH, 1, D), jnp.float32),
            "fc1_w": 0.02 * jax.random.normal(keys[8], (DEPTH, MLP_DIM, D), jnp.float32),
            "fc1_b": 0.01 * jax.random.normal(keys[9], (DEPTH, 1, MLP_DIM), jnp.float32),
            "fc2_w": 0.02 * jax.random.normal(keys[10], (DEPTH, D, MLP_DIM), jnp.float32),
            "fc2_b": 0.01 * jax.random.normal(keys[11], (DEPTH, 1, D), jnp.float32),
        },
    }


def vit_conv_forward(x, params, patch_rc):
    """x: (N, C, H, W) float32; returns features at stages (2, 5, 8, 11). dropout=False path."""
    N, C, H, W = x.shape
    gh, gw = patch_rc
    D = EMBED_DIM
    Tp = gh * gw
    T = 1 + Tp
    K = C * PATCH * PATCH

    # rearrange NCHW into a (B*Tp, K) patch matrix so the 16x16/s16 conv is one matmul
    p = x.reshape(N, C, gh, PATCH, gw, PATCH).transpose(0, 2, 4, 1, 3, 5)
    p = p.reshape(N * Tp, K).astype(jnp.bfloat16)

    # host-side weight prep: transpose to (K, N) contraction layout + bf16 for the MXU
    w_flat = params["proj_w"].reshape(D, K).T.astype(jnp.bfloat16)
    blk = params["blocks"]
    blocks = {
        "ln1_g": blk["ln1_g"], "ln1_b": blk["ln1_b"],
        "qkv_w": jnp.transpose(blk["qkv_w"], (0, 2, 1)).astype(jnp.bfloat16),
        "qkv_b": blk["qkv_b"],
        "proj_w": jnp.transpose(blk["proj_w"], (0, 2, 1)).astype(jnp.bfloat16),
        "proj_b": blk["proj_b"],
        "ln2_g": blk["ln2_g"], "ln2_b": blk["ln2_b"],
        "fc1_w": jnp.transpose(blk["fc1_w"], (0, 2, 1)).astype(jnp.bfloat16),
        "fc1_b": blk["fc1_b"],
        "fc2_w": jnp.transpose(blk["fc2_w"], (0, 2, 1)).astype(jnp.bfloat16),
        "fc2_b": blk["fc2_b"],
    }

    # pos-embed bilinear resize (constant per resolution; kept in glue, done once)
    token, grid = params["pos_embed"][:, :1], params["pos_embed"][:, 1:]
    grid = grid.transpose(0, 2, 1).reshape(1, D, PATCH_D, PATCH_D)
    grid = _bilinear_upsample_align_corners(grid, gh, gw)
    grid = grid.reshape(1, D, Tp).transpose(0, 2, 1)
    pos = jnp.concatenate([token, grid], axis=1).reshape(T, D)

    feats = vit_forward_fused(p, w_flat, params["proj_b"].reshape(1, D),
                              params["cls_token"].reshape(1, D), pos, blocks)
    # (4, B*T, D) -> list of (B, T, D)
    return [feats[i].reshape(N, T, D) for i in range(len(STAGES))]


if __name__ == "__main__":
    key = jax.random.PRNGKey(0)
    pkey, xkey = jax.random.split(key)
    params = init_params(pkey)

    N, C, H, W = 2, 3, 32, 32
    x = jax.random.normal(xkey, (N, C, H, W), jnp.float32)

    feats = vit_conv_forward(x, params, (H // PATCH, W // PATCH))
    feats = [jax.block_until_ready(f) for f in feats]

    T = 1 + (H // PATCH) * (W // PATCH)
    assert len(feats) == len(STAGES)
    assert all(f.shape == (N, T, EMBED_DIM) for f in feats)
    assert all(bool(jnp.all(jnp.isfinite(f))) for f in feats)
    print("KERNEL_OK")
</pallas_src>

<mosaic_0001>
module attributes {stable_mosaic.version = 11 : i64} {
  func.func @_vit_fused_kernel(%arg0: i32, %arg1: i32, %arg2: memref<8x768xbf16, #tpu.memory_space<vmem>>, %arg3: memref<768x32xbf16, #tpu.memory_space<vmem>>, %arg4: memref<1x32xf32, #tpu.memory_space<vmem>>, %arg5: memref<1x32xf32, #tpu.memory_space<vmem>>, %arg6: memref<5x32xf32, #tpu.memory_space<vmem>>, %arg7: memref<1x1x32xf32, #tpu.memory_space<vmem>>, %arg8: memref<1x1x32xf32, #tpu.memory_space<vmem>>, %arg9: memref<1x32x96xbf16, #tpu.memory_space<vmem>>, %arg10: memref<1x1x96xf32, #tpu.memory_space<vmem>>, %arg11: memref<1x32x32xbf16, #tpu.memory_space<vmem>>, %arg12: memref<1x1x32xf32, #tpu.memory_space<vmem>>, %arg13: memref<1x1x32xf32, #tpu.memory_space<vmem>>, %arg14: memref<1x1x32xf32, #tpu.memory_space<vmem>>, %arg15: memref<1x32x128xbf16, #tpu.memory_space<vmem>>, %arg16: memref<1x1x128xf32, #tpu.memory_space<vmem>>, %arg17: memref<1x128x32xbf16, #tpu.memory_space<vmem>>, %arg18: memref<1x1x32xf32, #tpu.memory_space<vmem>>, %arg19: memref<4x10x32xf32, #tpu.memory_space<vmem>>, %arg20: memref<10x32xf32, #tpu.memory_space<vmem>>) attributes {dimension_semantics = [#tpu.dimension_semantics<parallel>, #tpu.dimension_semantics<arbitrary>], iteration_bounds = array<i64: 1, 12>, scalar_prefetch = 0 : i64, scratch_operands = 1 : i64, tpu.core_type = #tpu.core_type<tc>, window_params = [{transform_indices = @transform_0, window_bounds = array<i64: 8, 768>}, {pipeline_mode = #tpu.pipeline_mode<synchronous>, transform_indices = @transform_1, window_bounds = array<i64: 768, 32>}, {pipeline_mode = #tpu.pipeline_mode<synchronous>, transform_indices = @transform_2, window_bounds = array<i64: 1, 32>}, {pipeline_mode = #tpu.pipeline_mode<synchronous>, transform_indices = @transform_3, window_bounds = array<i64: 1, 32>}, {pipeline_mode = #tpu.pipeline_mode<synchronous>, transform_indices = @transform_4, window_bounds = array<i64: 5, 32>}, {transform_indices = @transform_5, window_bounds = array<i64: 1, 1, 32>}, {transform_indices = @transform_6, window_bounds = array<i64: 1, 1, 32>}, {transform_indices = @transform_7, window_bounds = array<i64: 1, 32, 96>}, {transform_indices = @transform_8, window_bounds = array<i64: 1, 1, 96>}, {transform_indices = @transform_9, window_bounds = array<i64: 1, 32, 32>}, {transform_indices = @transform_10, window_bounds = array<i64: 1, 1, 32>}, {transform_indices = @transform_11, window_bounds = array<i64: 1, 1, 32>}, {transform_indices = @transform_12, window_bounds = array<i64: 1, 1, 32>}, {transform_indices = @transform_13, window_bounds = array<i64: 1, 32, 128>}, {transform_indices = @transform_14, window_bounds = array<i64: 1, 1, 128>}, {transform_indices = @transform_15, window_bounds = array<i64: 1, 128, 32>}, {transform_indices = @transform_16, window_bounds = array<i64: 1, 1, 32>}, {transform_indices = @transform_17, window_bounds = array<i64: 4, 10, 32>}]} {
    %c0_i32 = arith.constant 0 : i32
    %0 = arith.cmpi eq, %arg1, %c0_i32 : i32
    %1 = arith.extui %0 : i1 to i32
    %c0_i32_0 = arith.constant 0 : i32
    %2 = arith.cmpi ne, %1, %c0_i32_0 : i32
    scf.if %2 {
      %c0_81 = arith.constant 0 : index
      %c0_82 = arith.constant 0 : index
      %208 = vector.load %arg2[%c0_81, %c0_82] : memref<8x768xbf16, #tpu.memory_space<vmem>>, vector<8x768xbf16>
      %c0_83 = arith.constant 0 : index
      %c0_84 = arith.constant 0 : index
      %209 = vector.load %arg3[%c0_83, %c0_84] : memref<768x32xbf16, #tpu.memory_space<vmem>>, vector<768x32xbf16>
      %cst_85 = arith.constant dense<0.000000e+00> : vector<8x32xf32>
      %210 = tpu.matmul %208, %209, %cst_85 {dimension_numbers = #tpu.dot_dimension_numbers<[1], [0], [0], [1], [0, 0, 1, 1], [], []>} : vector<8x768xbf16>, vector<768x32xbf16>, vector<8x32xf32> -> vector<8x32xf32>
      %c0_86 = arith.constant 0 : index
      %c0_87 = arith.constant 0 : index
      %211 = vector.load %arg4[%c0_86, %c0_87] : memref<1x32xf32, #tpu.memory_space<vmem>>, vector<1x32xf32>
      %212 = vector.broadcast %211 : vector<1x32xf32> to vector<8x32xf32>
      %213 = arith.addf %210, %212 : vector<8x32xf32>
      %c0_88 = arith.constant 0 : index
      %c0_89 = arith.constant 0 : index
      %214 = vector.load %arg5[%c0_88, %c0_89] : memref<1x32xf32, #tpu.memory_space<vmem>>, vector<1x32xf32>
      %c0_90 = arith.constant 0 : index
      %c0_91 = arith.constant 0 : index
      %215 = vector.load %arg6[%c0_90, %c0_91] : memref<5x32xf32, #tpu.memory_space<vmem>>, vector<1x32xf32>
      %216 = arith.addf %214, %215 : vector<1x32xf32>
      %c1 = arith.constant 1 : index
      %c0_92 = arith.constant 0 : index
      %217 = vector.load %arg6[%c1, %c0_92] : memref<5x32xf32, #tpu.memory_space<vmem>>, vector<4x32xf32>
      %218 = vector.extract_strided_slice %213 {offsets = [0, 0], sizes = [4, 32], strides = [1, 1]} : vector<8x32xf32> to vector<4x32xf32>
      %219 = arith.addf %218, %217 : vector<4x32xf32>
      %220 = vector.extract_strided_slice %213 {offsets = [4, 0], sizes = [4, 32], strides = [1, 1]} : vector<8x32xf32> to vector<4x32xf32>
      %221 = arith.addf %220, %217 : vector<4x32xf32>
      %222 = tpu.concatenate %216, %219, %216, %221 in 0 : vector<1x32xf32>, vector<4x32xf32>, vector<1x32xf32>, vector<4x32xf32> -> vector<10x32xf32>
      %c0_93 = arith.constant 0 : index
      %c0_94 = arith.constant 0 : index
      %223 = vector.load %arg20[%c0_93, %c0_94] : memref<10x32xf32, #tpu.memory_space<vmem>>, vector<10x32xf32>
      tpu.vector_store %arg20[%c0_93, %c0_94], %222 {strides = array<i32>} : memref<10x32xf32, #tpu.memory_space<vmem>>, vector<10x32xf32>,
    } else {
    }
    %c0 = arith.constant 0 : index
    %c0_1 = arith.constant 0 : index
    %3 = vector.load %arg20[%c0, %c0_1] : memref<10x32xf32, #tpu.memory_space<vmem>>, vector<10x32xf32>
    %c0_2 = arith.constant 0 : index
    %c0_3 = arith.constant 0 : index
    %c0_4 = arith.constant 0 : index
    %4 = vector.load %arg7[%c0_2, %c0_3, %c0_4] : memref<1x1x32xf32, #tpu.memory_space<vmem>>, vector<1x1x32xf32>
    %5 = vector.shape_cast %4 : vector<1x1x32xf32> to vector<1x32xf32>
    %c0_5 = arith.constant 0 : index
    %c0_6 = arith.constant 0 : index
    %c0_7 = arith.constant 0 : index
    %6 = vector.load %arg8[%c0_5, %c0_6, %c0_7] : memref<1x1x32xf32, #tpu.memory_space<vmem>>, vector<1x1x32xf32>
    %7 = vector.shape_cast %6 : vector<1x1x32xf32> to vector<1x32xf32>
    %cst = arith.constant dense<0.000000e+00> : vector<10xf32>
    %8 = vector.multi_reduction <add>, %3, %cst [1] : vector<10x32xf32> to vector<10xf32>
    %9 = vector.shape_cast %8 : vector<10xf32> to vector<10x1xf32>
    %cst_8 = arith.constant 3.200000e+01 : f32
    %10 = vector.broadcast %cst_8 : f32 to vector<10x1xf32>
    %11 = arith.divf %9, %10 : vector<10x1xf32>
    %12 = vector.broadcast %11 : vector<10x1xf32> to vector<10x32xf32>
    %13 = arith.subf %3, %12 : vector<10x32xf32>
    %14 = arith.mulf %13, %13 : vector<10x32xf32>
    %cst_9 = arith.constant dense<0.000000e+00> : vector<10xf32>
    %15 = vector.multi_reduction <add>, %14, %cst_9 [1] : vector<10x32xf32> to vector<10xf32>
    %16 = vector.shape_cast %15 : vector<10xf32> to vector<10x1xf32>
    %cst_10 = arith.constant 3.200000e+01 : f32
    %17 = vector.broadcast %cst_10 : f32 to vector<10x1xf32>
    %18 = arith.divf %16, %17 : vector<10x1xf32>
    %cst_11 = arith.constant 9.99999997E-7 : f32
    %19 = vector.broadcast %cst_11 : f32 to vector<10x1xf32>
    %20 = arith.addf %18, %19 : vector<10x1xf32>
    %21 = math.rsqrt %20 : vector<10x1xf32>
    %22 = vector.broadcast %21 : vector<10x1xf32> to vector<10x32xf32>
    %23 = arith.mulf %13, %22 : vector<10x32xf32>
    %24 = vector.broadcast %5 : vector<1x32xf32> to vector<10x32xf32>
    %25 = arith.mulf %23, %24 : vector<10x32xf32>
    %26 = vector.broadcast %7 : vector<1x32xf32> to vector<10x32xf32>
    %27 = arith.addf %25, %26 : vector<10x32xf32>
    %28 = arith.truncf %27 : vector<10x32xf32> to vector<10x32xbf16>
    %c0_12 = arith.constant 0 : index
    %c0_13 = arith.constant 0 : index
    %c0_14 = arith.constant 0 : index
    %29 = vector.load %arg9[%c0_12, %c0_13, %c0_14] : memref<1x32x96xbf16, #tpu.memory_space<vmem>>, vector<1x32x96xbf16>
    %30 = vector.shape_cast %29 : vector<1x32x96xbf16> to vector<32x96xbf16>
    %cst_15 = arith.constant dense<0.000000e+00> : vector<10x96xf32>
    %31 = tpu.matmul %28, %30, %cst_15 {dimension_numbers = #tpu.dot_dimension_numbers<[1], [0], [0], [1], [0, 0, 1, 1], [], []>} : vector<10x32xbf16>, vector<32x96xbf16>, vector<10x96xf32> -> vector<10x96xf32>
    %c0_16 = arith.constant 0 : index
    %c0_17 = arith.constant 0 : index
    %c0_18 = arith.constant 0 : index
    %32 = vector.load %arg10[%c0_16, %c0_17, %c0_18] : memref<1x1x96xf32, #tpu.memory_space<vmem>>, vector<1x1x96xf32>
    %33 = vector.shape_cast %32 : vector<1x1x96xf32> to vector<1x96xf32>
    %34 = vector.broadcast %33 : vector<1x96xf32> to vector<10x96xf32>
    %35 = arith.addf %31, %34 : vector<10x96xf32>
    %36 = vector.extract_strided_slice %35 {offsets = [0, 0], sizes = [10, 32], strides = [1, 1]} : vector<10x96xf32> to vector<10x32xf32>
    %37 = vector.extract_strided_slice %35 {offsets = [0, 32], sizes = [10, 32], strides = [1, 1]} : vector<10x96xf32> to vector<10x32xf32>
    %38 = vector.extract_strided_slice %35 {offsets = [0, 64], sizes = [10, 32], strides = [1, 1]} : vector<10x96xf32> to vector<10x32xf32>
    %39 = vector.extract_strided_slice %36 {offsets = [0, 0], sizes = [5, 32], strides = [1, 1]} : vector<10x32xf32> to vector<5x32xf32>
    %40 = vector.extract_strided_slice %37 {offsets = [0, 0], sizes = [5, 32], strides = [1, 1]} : vector<10x32xf32> to vector<5x32xf32>
    %41 = vector.extract_strided_slice %38 {offsets = [0, 0], sizes = [5, 32], strides = [1, 1]} : vector<10x32xf32> to vector<5x32xf32>
    %42 = vector.extract_strided_slice %39 {offsets = [0, 0], sizes = [5, 16], strides = [1, 1]} : vector<5x32xf32> to vector<5x16xf32>
    %cst_19 = arith.constant 2.500000e-01 : f32
    %43 = vector.broadcast %cst_19 : f32 to vector<5x16xf32>
    %44 = arith.mulf %42, %43 : vector<5x16xf32>
    %45 = arith.truncf %44 : vector<5x16xf32> to vector<5x16xbf16>
    %46 = vector.extract_strided_slice %40 {offsets = [0, 0], sizes = [5, 16], strides = [1, 1]} : vector<5x32xf32> to vector<5x16xf32>
    %47 = arith.truncf %46 : vector<5x16xf32> to vector<5x16xbf16>
    %cst_20 = arith.constant dense<0.000000e+00> : vector<5x5xf32>
    %48 = tpu.matmul %45, %47, %cst_20 {dimension_numbers = #tpu.dot_dimension_numbers<[1], [1], [0], [0], [0, 0, 1, 0], [], []>} : vector<5x16xbf16>, vector<5x16xbf16>, vector<5x5xf32> -> vector<5x5xf32>
    %cst_21 = arith.constant dense<0xFF800000> : vector<5xf32>
    %49 = vector.multi_reduction <maximumf>, %48, %cst_21 [1] : vector<5x5xf32> to vector<5xf32>
    %50 = vector.shape_cast %49 : vector<5xf32> to vector<5x1xf32>
    %51 = vector.broadcast %50 : vector<5x1xf32> to vector<5x5xf32>
    %52 = arith.subf %48, %51 : vector<5x5xf32>
    %53 = math.exp %52 : vector<5x5xf32>
    %cst_22 = arith.constant dense<0.000000e+00> : vector<5xf32>
    %54 = vector.multi_reduction <add>, %53, %cst_22 [1] : vector<5x5xf32> to vector<5xf32>
    %55 = vector.shape_cast %54 : vector<5xf32> to vector<5x1xf32>
    %56 = tpu.reciprocal %55 {approx = true} : vector<5x1xf32> -> vector<5x1xf32>
    %57 = vector.broadcast %56 : vector<5x1xf32> to vector<5x5xf32>
    %58 = arith.mulf %53, %57 : vector<5x5xf32>
    %59 = arith.truncf %58 : vector<5x5xf32> to vector<5x5xbf16>
    %60 = vector.extract_strided_slice %41 {offsets = [0, 0], sizes = [5, 16], strides = [1, 1]} : vector<5x32xf32> to vector<5x16xf32>
    %61 = arith.truncf %60 : vector<5x16xf32> to vector<5x16xbf16>
    %cst_23 = arith.constant dense<0.000000e+00> : vector<5x16xf32>
    %62 = tpu.matmul %59, %61, %cst_23 {dimension_numbers = #tpu.dot_dimension_numbers<[1], [0], [0], [1], [0, 0, 1, 1], [], []>} : vector<5x5xbf16>, vector<5x16xbf16>, vector<5x16xf32> -> vector<5x16xf32>
    %63 = vector.extract_strided_slice %39 {offsets = [0, 16], sizes = [5, 16], strides = [1, 1]} : vector<5x32xf32> to vector<5x16xf32>
    %cst_24 = arith.constant 2.500000e-01 : f32
    %64 = vector.broadcast %cst_24 : f32 to vector<5x16xf32>
    %65 = arith.mulf %63, %64 : vector<5x16xf32>
    %66 = arith.truncf %65 : vector<5x16xf32> to vector<5x16xbf16>
    %67 = vector.extract_strided_slice %40 {offsets = [0, 16], sizes = [5, 16], strides = [1, 1]} : vector<5x32xf32> to vector<5x16xf32>
    %68 = arith.truncf %67 : vector<5x16xf32> to vector<5x16xbf16>
    %cst_25 = arith.constant dense<0.000000e+00> : vector<5x5xf32>
    %69 = tpu.matmul %66, %68, %cst_25 {dimension_numbers = #tpu.dot_dimension_numbers<[1], [1], [0], [0], [0, 0, 1, 0], [], []>} : vector<5x16xbf16>, vector<5x16xbf16>, vector<5x5xf32> -> vector<5x5xf32>
    %cst_26 = arith.constant dense<0xFF800000> : vector<5xf32>
    %70 = vector.multi_reduction <maximumf>, %69, %cst_26 [1] : vector<5x5xf32> to vector<5xf32>
    %71 = vector.shape_cast %70 : vector<5xf32> to vector<5x1xf32>
    %72 = vector.broadcast %71 : vector<5x1xf32> to vector<5x5xf32>
    %73 = arith.subf %69, %72 : vector<5x5xf32>
    %74 = math.exp %73 : vector<5x5xf32>
    %cst_27 = arith.constant dense<0.000000e+00> : vector<5xf32>
    %75 = vector.multi_reduction <add>, %74, %cst_27 [1] : vector<5x5xf32> to vector<5xf32>
    %76 = vector.shape_cast %75 : vector<5xf32> to vector<5x1xf32>
    %77 = tpu.reciprocal %76 {approx = true} : vector<5x1xf32> -> vector<5x1xf32>
    %78 = vector.broadcast %77 : vector<5x1xf32> to vector<5x5xf32>
    %79 = arith.mulf %74, %78 : vector<5x5xf32>
    %80 = arith.truncf %79 : vector<5x5xf32> to vector<5x5xbf16>
    %81 = vector.extract_strided_slice %41 {offsets = [0, 16], sizes = [5, 16], strides = [1, 1]} : vector<5x32xf32> to vector<5x16xf32>
    %82 = arith.truncf %81 : vector<5x16xf32> to vector<5x16xbf16>
    %cst_28 = arith.constant dense<0.000000e+00> : vector<5x16xf32>
    %83 = tpu.matmul %80, %82, %cst_28 {dimension_numbers = #tpu.dot_dimension_numbers<[1], [0], [0], [1], [0, 0, 1, 1], [], []>} : vector<5x5xbf16>, vector<5x16xbf16>, vector<5x16xf32> -> vector<5x16xf32>
    %84 = tpu.concatenate %62, %83 in 1 : vector<5x16xf32>, vector<5x16xf32> -> vector<5x32xf32>
    %85 = vector.extract_strided_slice %36 {offsets = [5, 0], sizes = [5, 32], strides = [1, 1]} : vector<10x32xf32> to vector<5x32xf32>
    %86 = vector.extract_strided_slice %37 {offsets = [5, 0], sizes = [5, 32], strides = [1, 1]} : vector<10x32xf32> to vector<5x32xf32>
    %87 = vector.extract_strided_slice %38 {offsets = [5, 0], sizes = [5, 32], strides = [1, 1]} : vector<10x32xf32> to vector<5x32xf32>
    %88 = vector.extract_strided_slice %85 {offsets = [0, 0], sizes = [5, 16], strides = [1, 1]} : vector<5x32xf32> to vector<5x16xf32>
    %cst_29 = arith.constant 2.500000e-01 : f32
    %89 = vector.broadcast %cst_29 : f32 to vector<5x16xf32>
    %90 = arith.mulf %88, %89 : vector<5x16xf32>
    %91 = arith.truncf %90 : vector<5x16xf32> to vector<5x16xbf16>
    %92 = vector.extract_strided_slice %86 {offsets = [0, 0], sizes = [5, 16], strides = [1, 1]} : vector<5x32xf32> to vector<5x16xf32>
    %93 = arith.truncf %92 : vector<5x16xf32> to vector<5x16xbf16>
    %cst_30 = arith.constant dense<0.000000e+00> : vector<5x5xf32>
    %94 = tpu.matmul %91, %93, %cst_30 {dimension_numbers = #tpu.dot_dimension_numbers<[1], [1], [0], [0], [0, 0, 1, 0], [], []>} : vector<5x16xbf16>, vector<5x16xbf16>, vector<5x5xf32> -> vector<5x5xf32>
    %cst_31 = arith.constant dense<0xFF800000> : vector<5xf32>
    %95 = vector.multi_reduction <maximumf>, %94, %cst_31 [1] : vector<5x5xf32> to vector<5xf32>
    %96 = vector.shape_cast %95 : vector<5xf32> to vector<5x1xf32>
    %97 = vector.broadcast %96 : vector<5x1xf32> to vector<5x5xf32>
    %98 = arith.subf %94, %97 : vector<5x5xf32>
    %99 = math.exp %98 : vector<5x5xf32>
    %cst_32 = arith.constant dense<0.000000e+00> : vector<5xf32>
    %100 = vector.multi_reduction <add>, %99, %cst_32 [1] : vector<5x5xf32> to vector<5xf32>
    %101 = vector.shape_cast %100 : vector<5xf32> to vector<5x1xf32>
    %102 = tpu.reciprocal %101 {approx = true} : vector<5x1xf32> -> vector<5x1xf32>
    %103 = vector.broadcast %102 : vector<5x1xf32> to vector<5x5xf32>
    %104 = arith.mulf %99, %103 : vector<5x5xf32>
    %105 = arith.truncf %104 : vector<5x5xf32> to vector<5x5xbf16>
    %106 = vector.extract_strided_slice %87 {offsets = [0, 0], sizes = [5, 16], strides = [1, 1]} : vector<5x32xf32> to vector<5x16xf32>
    %107 = arith.truncf %106 : vector<5x16xf32> to vector<5x16xbf16>
    %cst_33 = arith.constant dense<0.000000e+00> : vector<5x16xf32>
    %108 = tpu.matmul %105, %107, %cst_33 {dimension_numbers = #tpu.dot_dimension_numbers<[1], [0], [0], [1], [0, 0, 1, 1], [], []>} : vector<5x5xbf16>, vector<5x16xbf16>, vector<5x16xf32> -> vector<5x16xf32>
    %109 = vector.extract_strided_slice %85 {offsets = [0, 16], sizes = [5, 16], strides = [1, 1]} : vector<5x32xf32> to vector<5x16xf32>
    %cst_34 = arith.constant 2.500000e-01 : f32
    %110 = vector.broadcast %cst_34 : f32 to vector<5x16xf32>
    %111 = arith.mulf %109, %110 : vector<5x16xf32>
    %112 = arith.truncf %111 : vector<5x16xf32> to vector<5x16xbf16>
    %113 = vector.extract_strided_slice %86 {offsets = [0, 16], sizes = [5, 16], strides = [1, 1]} : vector<5x32xf32> to vector<5x16xf32>
    %114 = arith.truncf %113 : vector<5x16xf32> to vector<5x16xbf16>
    %cst_35 = arith.constant dense<0.000000e+00> : vector<5x5xf32>
    %115 = tpu.matmul %112, %114, %cst_35 {dimension_numbers = #tpu.dot_dimension_numbers<[1], [1], [0], [0], [0, 0, 1, 0], [], []>} : vector<5x16xbf16>, vector<5x16xbf16>, vector<5x5xf32> -> vector<5x5xf32>
    %cst_36 = arith.constant dense<0xFF800000> : vector<5xf32>
    %116 = vector.multi_reduction <maximumf>, %115, %cst_36 [1] : vector<5x5xf32> to vector<5xf32>
    %117 = vector.shape_cast %116 : vector<5xf32> to vector<5x1xf32>
    %118 = vector.broadcast %117 : vector<5x1xf32> to vector<5x5xf32>
    %119 = arith.subf %115, %118 : vector<5x5xf32>
    %120 = math.exp %119 : vector<5x5xf32>
    %cst_37 = arith.constant dense<0.000000e+00> : vector<5xf32>
    %121 = vector.multi_reduction <add>, %120, %cst_37 [1] : vector<5x5xf32> to vector<5xf32>
    %122 = vector.shape_cast %121 : vector<5xf32> to vector<5x1xf32>
    %123 = tpu.reciprocal %122 {approx = true} : vector<5x1xf32> -> vector<5x1xf32>
    %124 = vector.broadcast %123 : vector<5x1xf32> to vector<5x5xf32>
    %125 = arith.mulf %120, %124 : vector<5x5xf32>
    %126 = arith.truncf %125 : vector<5x5xf32> to vector<5x5xbf16>
    %127 = vector.extract_strided_slice %87 {offsets = [0, 16], sizes = [5, 16], strides = [1, 1]} : vector<5x32xf32> to vector<5x16xf32>
    %128 = arith.truncf %127 : vector<5x16xf32> to vector<5x16xbf16>
    %cst_38 = arith.constant dense<0.000000e+00> : vector<5x16xf32>
    %129 = tpu.matmul %126, %128, %cst_38 {dimension_numbers = #tpu.dot_dimension_numbers<[1], [0], [0], [1], [0, 0, 1, 1], [], []>} : vector<5x5xbf16>, vector<5x16xbf16>, vector<5x16xf32> -> vector<5x16xf32>
    %130 = tpu.concatenate %108, %129 in 1 : vector<5x16xf32>, vector<5x16xf32> -> vector<5x32xf32>
    %131 = tpu.concatenate %84, %130 in 0 : vector<5x32xf32>, vector<5x32xf32> -> vector<10x32xf32>
    %132 = arith.truncf %131 : vector<10x32xf32> to vector<10x32xbf16>
    %c0_39 = arith.constant 0 : index
    %c0_40 = arith.constant 0 : index
    %c0_41 = arith.constant 0 : index
    %133 = vector.load %arg11[%c0_39, %c0_40, %c0_41] : memref<1x32x32xbf16, #tpu.memory_space<vmem>>, vector<1x32x32xbf16>
    %134 = vector.shape_cast %133 : vector<1x32x32xbf16> to vector<32x32xbf16>
    %cst_42 = arith.constant dense<0.000000e+00> : vector<10x32xf32>
    %135 = tpu.matmul %132, %134, %cst_42 {dimension_numbers = #tpu.dot_dimension_numbers<[1], [0], [0], [1], [0, 0, 1, 1], [], []>} : vector<10x32xbf16>, vector<32x32xbf16>, vector<10x32xf32> -> vector<10x32xf32>
    %c0_43 = arith.constant 0 : index
    %c0_44 = arith.constant 0 : index
    %c0_45 = arith.constant 0 : index
    %136 = vector.load %arg12[%c0_43, %c0_44, %c0_45] : memref<1x1x32xf32, #tpu.memory_space<vmem>>, vector<1x1x32xf32>
    %137 = vector.shape_cast %136 : vector<1x1x32xf32> to vector<1x32xf32>
    %138 = vector.broadcast %137 : vector<1x32xf32> to vector<10x32xf32>
    %139 = arith.addf %135, %138 : vector<10x32xf32>
    %140 = arith.addf %3, %139 : vector<10x32xf32>
    %c0_46 = arith.constant 0 : index
    %c0_47 = arith.constant 0 : index
    %c0_48 = arith.constant 0 : index
    %141 = vector.load %arg13[%c0_46, %c0_47, %c0_48] : memref<1x1x32xf32, #tpu.memory_space<vmem>>, vector<1x1x32xf32>
    %142 = vector.shape_cast %141 : vector<1x1x32xf32> to vector<1x32xf32>
    %c0_49 = arith.constant 0 : index
    %c0_50 = arith.constant 0 : index
    %c0_51 = arith.constant 0 : index
    %143 = vector.load %arg14[%c0_49, %c0_50, %c0_51] : memref<1x1x32xf32, #tpu.memory_space<vmem>>, vector<1x1x32xf32>
    %144 = vector.shape_cast %143 : vector<1x1x32xf32> to vector<1x32xf32>
    %cst_52 = arith.constant dense<0.000000e+00> : vector<10xf32>
    %145 = vector.multi_reduction <add>, %140, %cst_52 [1] : vector<10x32xf32> to vector<10xf32>
    %146 = vector.shape_cast %145 : vector<10xf32> to vector<10x1xf32>
    %cst_53 = arith.constant 3.200000e+01 : f32
    %147 = vector.broadcast %cst_53 : f32 to vector<10x1xf32>
    %148 = arith.divf %146, %147 : vector<10x1xf32>
    %149 = vector.broadcast %148 : vector<10x1xf32> to vector<10x32xf32>
    %150 = arith.subf %140, %149 : vector<10x32xf32>
    %151 = arith.mulf %150, %150 : vector<10x32xf32>
    %cst_54 = arith.constant dense<0.000000e+00> : vector<10xf32>
    %152 = vector.multi_reduction <add>, %151, %cst_54 [1] : vector<10x32xf32> to vector<10xf32>
    %153 = vector.shape_cast %152 : vector<10xf32> to vector<10x1xf32>
    %cst_55 = arith.constant 3.200000e+01 : f32
    %154 = vector.broadcast %cst_55 : f32 to vector<10x1xf32>
    %155 = arith.divf %153, %154 : vector<10x1xf32>
    %cst_56 = arith.constant 9.99999997E-7 : f32
    %156 = vector.broadcast %cst_56 : f32 to vector<10x1xf32>
    %157 = arith.addf %155, %156 : vector<10x1xf32>
    %158 = math.rsqrt %157 : vector<10x1xf32>
    %159 = vector.broadcast %158 : vector<10x1xf32> to vector<10x32xf32>
    %160 = arith.mulf %150, %159 : vector<10x32xf32>
    %161 = vector.broadcast %142 : vector<1x32xf32> to vector<10x32xf32>
    %162 = arith.mulf %160, %161 : vector<10x32xf32>
    %163 = vector.broadcast %144 : vector<1x32xf32> to vector<10x32xf32>
    %164 = arith.addf %162, %163 : vector<10x32xf32>
    %165 = arith.truncf %164 : vector<10x32xf32> to vector<10x32xbf16>
    %c0_57 = arith.constant 0 : index
    %c0_58 = arith.constant 0 : index
    %c0_59 = arith.constant 0 : index
    %166 = vector.load %arg15[%c0_57, %c0_58, %c0_59] : memref<1x32x128xbf16, #tpu.memory_space<vmem>>, vector<1x32x128xbf16>
    %167 = vector.shape_cast %166 : vector<1x32x128xbf16> to vector<32x128xbf16>
    %cst_60 = arith.constant dense<0.000000e+00> : vector<10x128xf32>
    %168 = tpu.matmul %165, %167, %cst_60 {dimension_numbers = #tpu.dot_dimension_numbers<[1], [0], [0], [1], [0, 0, 1, 1], [], []>} : vector<10x32xbf16>, vector<32x128xbf16>, vector<10x128xf32> -> vector<10x128xf32>
    %c0_61 = arith.constant 0 : index
    %c0_62 = arith.constant 0 : index
    %c0_63 = arith.constant 0 : index
    %169 = vector.load %arg16[%c0_61, %c0_62, %c0_63] : memref<1x1x128xf32, #tpu.memory_space<vmem>>, vector<1x1x128xf32>
    %170 = vector.shape_cast %169 : vector<1x1x128xf32> to vector<1x128xf32>
    %171 = vector.broadcast %170 : vector<1x128xf32> to vector<10x128xf32>
    %172 = arith.addf %168, %171 : vector<10x128xf32>
    %cst_64 = arith.constant 5.000000e-01 : f32
    %173 = vector.broadcast %cst_64 : f32 to vector<10x128xf32>
    %174 = arith.mulf %173, %172 : vector<10x128xf32>
    %cst_65 = arith.constant 4.471500e-02 : f32
    %175 = vector.broadcast %cst_65 : f32 to vector<10x128xf32>
    %176 = arith.mulf %175, %172 : vector<10x128xf32>
    %177 = arith.mulf %176, %172 : vector<10x128xf32>
    %178 = arith.mulf %177, %172 : vector<10x128xf32>
    %179 = arith.addf %172, %178 : vector<10x128xf32>
    %cst_66 = arith.constant 0.797884583 : f32
    %180 = vector.broadcast %cst_66 : f32 to vector<10x128xf32>
    %181 = arith.mulf %180, %179 : vector<10x128xf32>
    %182 = math.tanh %181 : vector<10x128xf32>
    %cst_67 = arith.constant 1.000000e+00 : f32
    %183 = vector.broadcast %cst_67 : f32 to vector<10x128xf32>
    %184 = arith.addf %183, %182 : vector<10x128xf32>
    %185 = arith.mulf %174, %184 : vector<10x128xf32>
    %186 = arith.truncf %185 : vector<10x128xf32> to vector<10x128xbf16>
    %c0_68 = arith.constant 0 : index
    %c0_69 = arith.constant 0 : index
    %c0_70 = arith.constant 0 : index
    %187 = vector.load %arg17[%c0_68, %c0_69, %c0_70] : memref<1x128x32xbf16, #tpu.memory_space<vmem>>, vector<1x128x32xbf16>
    %188 = vector.shape_cast %187 : vector<1x128x32xbf16> to vector<128x32xbf16>
    %cst_71 = arith.constant dense<0.000000e+00> : vector<10x32xf32>
    %189 = tpu.matmul %186, %188, %cst_71 {dimension_numbers = #tpu.dot_dimension_numbers<[1], [0], [0], [1], [0, 0, 1, 1], [], []>} : vector<10x128xbf16>, vector<128x32xbf16>, vector<10x32xf32> -> vector<10x32xf32>
    %c0_72 = arith.constant 0 : index
    %c0_73 = arith.constant 0 : index
    %c0_74 = arith.constant 0 : index
    %190 = vector.load %arg18[%c0_72, %c0_73, %c0_74] : memref<1x1x32xf32, #tpu.memory_space<vmem>>, vector<1x1x32xf32>
    %191 = vector.shape_cast %190 : vector<1x1x32xf32> to vector<1x32xf32>
    %192 = vector.broadcast %191 : vector<1x32xf32> to vector<10x32xf32>
    %193 = arith.addf %189, %192 : vector<10x32xf32>
    %194 = arith.addf %140, %193 : vector<10x32xf32>
    %c0_75 = arith.constant 0 : index
    %c0_76 = arith.constant 0 : index
    %195 = vector.load %arg20[%c0_75, %c0_76] : memref<10x32xf32, #tpu.memory_space<vmem>>, vector<10x32xf32>
    tpu.vector_store %arg20[%c0_75, %c0_76], %194 {strides = array<i32>} : memref<10x32xf32, #tpu.memory_space<vmem>>, vector<10x32xf32>,
    %c2_i32 = arith.constant 2 : i32
    %196 = arith.cmpi eq, %arg1, %c2_i32 : i32
    %197 = arith.extui %196 : i1 to i32
    %c0_i32_77 = arith.constant 0 : i32
    %198 = arith.cmpi ne, %197, %c0_i32_77 : i32
    scf.if %198 {
      %c0_81 = arith.constant 0 : index
      %c0_82 = arith.constant 0 : index
      %c0_83 = arith.constant 0 : index
      %208 = vector.load %arg19[%c0_81, %c0_82, %c0_83] : memref<4x10x32xf32, #tpu.memory_space<vmem>>, vector<1x10x32xf32>
      %209 = vector.shape_cast %208 : vector<1x10x32xf32> to vector<10x32xf32>
      %210 = vector.shape_cast %194 : vector<10x32xf32> to vector<1x10x32xf32>
      tpu.vector_store %arg19[%c0_81, %c0_82, %c0_83], %210 {strides = array<i32>} : memref<4x10x32xf32, #tpu.memory_space<vmem>>, vector<1x10x32xf32>,
    } else {
    }
    %c5_i32 = arith.constant 5 : i32
    %199 = arith.cmpi eq, %arg1, %c5_i32 : i32
    %200 = arith.extui %199 : i1 to i32
    %c0_i32_78 = arith.constant 0 : i32
    %201 = arith.cmpi ne, %200, %c0_i32_78 : i32
    scf.if %201 {
      %c1 = arith.constant 1 : index
      %c0_81 = arith.constant 0 : index
      %c0_82 = arith.constant 0 : index
      %208 = vector.load %arg19[%c1, %c0_81, %c0_82] : memref<4x10x32xf32, #tpu.memory_space<vmem>>, vector<1x10x32xf32>
      %209 = vector.shape_cast %208 : vector<1x10x32xf32> to vector<10x32xf32>
      %210 = vector.shape_cast %194 : vector<10x32xf32> to vector<1x10x32xf32>
      tpu.vector_store %arg19[%c1, %c0_81, %c0_82], %210 {strides = array<i32>} : memref<4x10x32xf32, #tpu.memory_space<vmem>>, vector<1x10x32xf32>,
    } else {
    }
    %c8_i32 = arith.constant 8 : i32
    %202 = arith.cmpi eq, %arg1, %c8_i32 : i32
    %203 = arith.extui %202 : i1 to i32
    %c0_i32_79 = arith.constant 0 : i32
    %204 = arith.cmpi ne, %203, %c0_i32_79 : i32
    scf.if %204 {
      %c2 = arith.constant 2 : index
      %c0_81 = arith.constant 0 : index
      %c0_82 = arith.constant 0 : index
      %208 = vector.load %arg19[%c2, %c0_81, %c0_82] : memref<4x10x32xf32, #tpu.memory_space<vmem>>, vector<1x10x32xf32>
      %209 = vector.shape_cast %208 : vector<1x10x32xf32> to vector<10x32xf32>
      %210 = vector.shape_cast %194 : vector<10x32xf32> to vector<1x10x32xf32>
      tpu.vector_store %arg19[%c2, %c0_81, %c0_82], %210 {strides = array<i32>} : memref<4x10x32xf32, #tpu.memory_space<vmem>>, vector<1x10x32xf32>,
    } else {
    }
    %c11_i32 = arith.constant 11 : i32
    %205 = arith.cmpi eq, %arg1, %c11_i32 : i32
    %206 = arith.extui %205 : i1 to i32
    %c0_i32_80 = arith.constant 0 : i32
    %207 = arith.cmpi ne, %206, %c0_i32_80 : i32
    scf.if %207 {
      %c3 = arith.constant 3 : index
      %c0_81 = arith.constant 0 : index
      %c0_82 = arith.constant 0 : index
      %208 = vector.load %arg19[%c3, %c0_81, %c0_82] : memref<4x10x32xf32, #tpu.memory_space<vmem>>, vector<1x10x32xf32>
      %209 = vector.shape_cast %208 : vector<1x10x32xf32> to vector<10x32xf32>
      %210 = vector.shape_cast %194 : vector<10x32xf32> to vector<1x10x32xf32>
      tpu.vector_store %arg19[%c3, %c0_81, %c0_82], %210 {strides = array<i32>} : memref<4x10x32xf32, #tpu.memory_space<vmem>>, vector<1x10x32xf32>,
    } else {
    }
    return
  }
  func.func @transform_0(%arg0: i32, %arg1: i32) -> (i32, i32) {
    %c0_i32 = arith.constant 0 : i32
    %c0_i32_0 = arith.constant 0 : i32
    return %arg0, %c0_i32 : i32, i32
  }
  func.func @transform_1(%arg0: i32, %arg1: i32) -> (i32, i32) {
    %c0_i32 = arith.constant 0 : i32
    %c0_i32_0 = arith.constant 0 : i32
    %c0_i32_1 = arith.constant 0 : i32
    return %c0_i32, %c0_i32_0 : i32, i32
  }
  func.func @transform_2(%arg0: i32, %arg1: i32) -> (i32, i32) {
    %c0_i32 = arith.constant 0 : i32
    %c0_i32_0 = arith.constant 0 : i32
    %c0_i32_1 = arith.constant 0 : i32
    return %c0_i32, %c0_i32_0 : i32, i32
  }
  func.func @transform_3(%arg0: i32, %arg1: i32) -> (i32, i32) {
    %c0_i32 = arith.constant 0 : i32
    %c0_i32_0 = arith.constant 0 : i32
    %c0_i32_1 = arith.constant 0 : i32
    return %c0_i32, %c0_i32_0 : i32, i32
  }
  func.func @transform_4(%arg0: i32, %arg1: i32) -> (i32, i32) {
    %c0_i32 = arith.constant 0 : i32
    %c0_i32_0 = arith.constant 0 : i32
    %c0_i32_1 = arith.constant 0 : i32
    return %c0_i32, %c0_i32_0 : i32, i32
  }
  func.func @transform_5(%arg0: i32, %arg1: i32) -> (i32, i32, i32) {
    %c0_i32 = arith.constant 0 : i32
    %c0_i32_0 = arith.constant 0 : i32
    %c0_i32_1 = arith.constant 0 : i32
    return %arg1, %c0_i32, %c0_i32_0 : i32, i32, i32
  }
  func.func @transform_6(%arg0: i32, %arg1: i32) -> (i32, i32, i32) {
    %c0_i32 = arith.constant 0 : i32
    %c0_i32_0 = arith.constant 0 : i32
    %c0_i32_1 = arith.constant 0 : i32
    return %arg1, %c0_i32, %c0_i32_0 : i32, i32, i32
  }
  func.func @transform_7(%arg0: i32, %arg1: i32) -> (i32, i32, i32) {
    %c0_i32 = arith.constant 0 : i32
    %c0_i32_0 = arith.constant 0 : i32
    %c0_i32_1 = arith.constant 0 : i32
    return %arg1, %c0_i32, %c0_i32_0 : i32, i32, i32
  }
  func.func @transform_8(%arg0: i32, %arg1: i32) -> (i32, i32, i32) {
    %c0_i32 = arith.constant 0 : i32
    %c0_i32_0 = arith.constant 0 : i32
    %c0_i32_1 = arith.constant 0 : i32
    return %arg1, %c0_i32, %c0_i32_0 : i32, i32, i32
  }
  func.func @transform_9(%arg0: i32, %arg1: i32) -> (i32, i32, i32) {
    %c0_i32 = arith.constant 0 : i32
    %c0_i32_0 = arith.constant 0 : i32
    %c0_i32_1 = arith.constant 0 : i32
    return %arg1, %c0_i32, %c0_i32_0 : i32, i32, i32
  }
  func.func @transform_10(%arg0: i32, %arg1: i32) -> (i32, i32, i32) {
    %c0_i32 = arith.constant 0 : i32
    %c0_i32_0 = arith.constant 0 : i32
    %c0_i32_1 = arith.constant 0 : i32
    return %arg1, %c0_i32, %c0_i32_0 : i32, i32, i32
  }
  func.func @transform_11(%arg0: i32, %arg1: i32) -> (i32, i32, i32) {
    %c0_i32 = arith.constant 0 : i32
    %c0_i32_0 = arith.constant 0 : i32
    %c0_i32_1 = arith.constant 0 : i32
    return %arg1, %c0_i32, %c0_i32_0 : i32, i32, i32
  }
  func.func @transform_12(%arg0: i32, %arg1: i32) -> (i32, i32, i32) {
    %c0_i32 = arith.constant 0 : i32
    %c0_i32_0 = arith.constant 0 : i32
    %c0_i32_1 = arith.constant 0 : i32
    return %arg1, %c0_i32, %c0_i32_0 : i32, i32, i32
  }
  func.func @transform_13(%arg0: i32, %arg1: i32) -> (i32, i32, i32) {
    %c0_i32 = arith.constant 0 : i32
    %c0_i32_0 = arith.constant 0 : i32
    %c0_i32_1 = arith.constant 0 : i32
    return %arg1, %c0_i32, %c0_i32_0 : i32, i32, i32
  }
  func.func @transform_14(%arg0: i32, %arg1: i32) -> (i32, i32, i32) {
    %c0_i32 = arith.constant 0 : i32
    %c0_i32_0 = arith.constant 0 : i32
    %c0_i32_1 = arith.constant 0 : i32
    return %arg1, %c0_i32, %c0_i32_0 : i32, i32, i32
  }
  func.func @transform_15(%arg0: i32, %arg1: i32) -> (i32, i32, i32) {
    %c0_i32 = arith.constant 0 : i32
    %c0_i32_0 = arith.constant 0 : i32
    %c0_i32_1 = arith.constant 0 : i32
    return %arg1, %c0_i32, %c0_i32_0 : i32, i32, i32
  }
  func.func @transform_16(%arg0: i32, %arg1: i32) -> (i32, i32, i32) {
    %c0_i32 = arith.constant 0 : i32
    %c0_i32_0 = arith.constant 0 : i32
    %c0_i32_1 = arith.constant 0 : i32
    return %arg1, %c0_i32, %c0_i32_0 : i32, i32, i32
  }
  func.func @transform_17(%arg0: i32, %arg1: i32) -> (i32, i32, i32) {
    %c0_i32 = arith.constant 0 : i32
    %c0_i32_0 = arith.constant 0 : i32
    %c0_i32_1 = arith.constant 0 : i32
    return %c0_i32, %arg0, %c0_i32_0 : i32, i32, i32
  }
}

</mosaic_0001>

<llo_original>
// kernel: tpu_custom_call.1
$region0: #{tpu_custom_call.1}
  #allocation0 [shape = 'u32[]', space=smem, size = 0x4, offset = 0x4, fixed_abs, tag = 'smem constant byte address 0x4 - core index']
  #allocation1 [shape = 'u32[144,128]{1,0:T(1,128)}', space=vmem, size = 0x12000, scoped, tag = 'internal scratch']
  #allocation2 [shape = 'f32[10,32]{1,0:T(8,128)}', space=vmem, size = 0x2000, scoped, tag = 'scratch operand']
  %s0 = inlined_call_operand.vmem [shape: bf16[8,768], index: 0, kind: input, shape index: {}]
  %s1 = inlined_call_operand.vmem [shape: bf16[768,32], index: 1, kind: input, shape index: {}]
  %s2 = inlined_call_operand.vmem [shape: f32[1,32], index: 2, kind: input, shape index: {}]
  %s3 = inlined_call_operand.vmem [shape: f32[1,32], index: 3, kind: input, shape index: {}]
  %s4 = inlined_call_operand.vmem [shape: f32[5,32], index: 4, kind: input, shape index: {}]
  %s5 = inlined_call_operand.vmem [shape: f32[12,1,32], index: 5, kind: input, shape index: {}]
  %s6 = inlined_call_operand.vmem [shape: f32[12,1,32], index: 6, kind: input, shape index: {}]
  %s7 = inlined_call_operand.vmem [shape: bf16[12,32,96], index: 7, kind: input, shape index: {}]
  %s8 = inlined_call_operand.vmem [shape: f32[12,1,96], index: 8, kind: input, shape index: {}]
  %s9 = inlined_call_operand.vmem [shape: bf16[12,32,32], index: 9, kind: input, shape index: {}]
  %s10 = inlined_call_operand.vmem [shape: f32[12,1,32], index: 10, kind: input, shape index: {}]
  %s11 = inlined_call_operand.vmem [shape: f32[12,1,32], index: 11, kind: input, shape index: {}]
  %s12 = inlined_call_operand.vmem [shape: f32[12,1,32], index: 12, kind: input, shape index: {}]
  %s13 = inlined_call_operand.vmem [shape: bf16[12,32,128], index: 13, kind: input, shape index: {}]
  %s14 = inlined_call_operand.vmem [shape: f32[12,1,128], index: 14, kind: input, shape index: {}]
  %s15 = inlined_call_operand.vmem [shape: bf16[12,128,32], index: 15, kind: input, shape index: {}]
  %s16 = inlined_call_operand.vmem [shape: f32[12,1,32], index: 16, kind: input, shape index: {}]
  %s17 = inlined_call_operand.vmem [shape: f32[4,10,32], index: 17, kind: output, shape index: {}]
  %s18 = sld [smem:[#allocation0]]
  $region121: #{tpu_custom_call.1} parent=0
    _
  %s20 = ssub.s32 1, %s18
  %s21 = scalar_select 0, %s20, %s18
  loop: start=0, step=1, limit=14
  $region2: #{tpu_custom_call.1} parent=0 // loop_pre_header
    _
  $region3: #{tpu_custom_call.1} parent=0 // loop_header
    %s23 = sphi 0, %s27
    %p24 = scmp.ge.s32.totalorder %s23, 14
    %s30 = sphi 0, %s42
    %s31 = sphi 0, %s38
    %s32 = sphi 0, %s30
    %s33 = sphi 0, %s31
    %s34 = sphi 0, %s32
    %s35 = sphi 0, %s33
    %s45 = sphi 0, %s47
    %s48 = sphi 0, %s45
    %s49 = sphi 0, %s48
    %s65 = sphi 0, %s49
    %s69 = sphi 0, %s69
    %s71 = sphi 0, %s69
    %s72 = sphi 0, %s71
    %s86 = sphi 0, %s72
    %s90 = sphi 0, %s90
    %s92 = sphi 0, %s90
    %s93 = sphi 0, %s92
    %s107 = sphi 0, %s93
    %s111 = sphi 0, %s111
    %s113 = sphi 0, %s111
    %s114 = sphi 0, %s113
    %s128 = sphi 0, %s114
    %s132 = sphi 0, %s132
    %s134 = sphi 0, %s132
    %s135 = sphi 0, %s134
    %s149 = sphi 0, %s135
    %s155 = sphi 0, %s157
    %s158 = sphi 0, %s155
    %s159 = sphi 0, %s158
    %s175 = sphi 0, %s159
    %s181 = sphi 0, %s183
    %s184 = sphi 0, %s181
    %s185 = sphi 0, %s184
    %s201 = sphi 0, %s185
    %s207 = sphi 0, %s209
    %s210 = sphi 0, %s207
    %s211 = sphi 0, %s210
    %s227 = sphi 0, %s211
    %s233 = sphi 0, %s235
    %s236 = sphi 0, %s233
    %s237 = sphi 0, %s236
    %s253 = sphi 0, %s237
    %s259 = sphi 0, %s261
    %s262 = sphi 0, %s259
    %s263 = sphi 0, %s262
    %s279 = sphi 0, %s263
    %s285 = sphi 0, %s287
    %s288 = sphi 0, %s285
    %s289 = sphi 0, %s288
    %s305 = sphi 0, %s289
    %s311 = sphi 0, %s313
    %s314 = sphi 0, %s311
    %s315 = sphi 0, %s314
    %s331 = sphi 0, %s315
    %s337 = sphi 0, %s339
    %s340 = sphi 0, %s337
    %s341 = sphi 0, %s340
    %s357 = sphi 0, %s341
    %s363 = sphi 0, %s365
    %s366 = sphi 0, %s363
    %s367 = sphi 0, %s366
    %s383 = sphi 0, %s367
    %s389 = sphi 0, %s391
    %s392 = sphi 0, %s389
    %s393 = sphi 0, %s392
    %s409 = sphi 0, %s393
    %s415 = sphi 0, %s417
    %s418 = sphi 0, %s415
    %s419 = sphi 0, %s418
    %s435 = sphi 0, %s419
    %s441 = sphi 0, %s443
    %s444 = sphi 0, %s441
    %s445 = sphi 0, %s444
    %s461 = sphi 0, %s445
    %s467 = sphi 0, %s469
    %s470 = sphi 0, %s467
    %s471 = sphi 0, %s470
    %s487 = sphi 0, %s471
  $region4: #{tpu_custom_call.1} parent=0 // loop_header_branch
    %26 = sbr.rel (%p24) target = $region8
  $region5: #{tpu_custom_call.1} parent=0 // loop_body
    %s28 = ssub.s32 %s23, 1
    %s29 = ssub.s32 %s23, 2
    %s36 = sadd.s32 1, %s31
    %p37 = scmp.ge.s32.totalorder %s36, 12
    %s38 = scalar_select %p37, 0, %s36
    %s39 = sadd.s32 1, %s30
    %s40 = scalar_select %p37, %s39, %s30
    %p41 = scmp.ge.s32.totalorder %s40, 1
    %s42 = scalar_select %p41, 0, %s40
    %s43 = ssub.s32 %s30, %s42
    %p44 = scmp.eq.s32.totalorder %s43, 0
    %s46 = sadd.s32 %s45, 1
    %s47 = scalar_select %p44, %s45, %s46
    %p50 = pneg %p44
    %p51 = scmp.eq.s32.totalorder %s23, 11
    %p52 = por %p50, %p51
    %p53 = scmp.ne.s32.totalorder %s45, %s48
    %p54 = scmp.eq.s32.totalorder %s23, 0
    %p55 = por %p53, %p54
    %p56 = scmp.ne.s32.totalorder %s45, %s48
    %p57 = scmp.eq.s32.totalorder %s28, 11
    %p58 = por %p56, %p57
    %p59 = scmp.ne.s32.totalorder %s48, %s49
    %p60 = scmp.eq.s32.totalorder %s28, 0
    %p61 = por %p59, %p60
    %p62 = scmp.ne.s32.totalorder %s48, %s49
    %p63 = scmp.eq.s32.totalorder %s29, 11
    %p64 = por %p62, %p63
    %p66 = scmp.ne.s32.totalorder %s49, %s65
    %p67 = scmp.eq.s32.totalorder %s29, 0
    %p68 = por %p66, %p67
    %s70 = sadd.s32 %s69, 1
    %p73 = scmp.eq.s32.totalorder %s23, 11
    %p74 = scmp.ne.s32.totalorder %s69, %s71
    %p75 = scmp.eq.s32.totalorder %s23, 0
    %p76 = por %p74, %p75
    %p77 = scmp.ne.s32.totalorder %s69, %s71
    %p78 = scmp.eq.s32.totalorder %s28, 11
    %p79 = por %p77, %p78
    %p80 = scmp.ne.s32.totalorder %s71, %s72
    %p81 = scmp.eq.s32.totalorder %s28, 0
    %p82 = por %p80, %p81
    %p83 = scmp.ne.s32.totalorder %s71, %s72
    %p84 = scmp.eq.s32.totalorder %s29, 11
    %p85 = por %p83, %p84
    %p87 = scmp.ne.s32.totalorder %s72, %s86
    %p88 = scmp.eq.s32.totalorder %s29, 0
    %p89 = por %p87, %p88
    %s91 = sadd.s32 %s90, 1
    %p94 = scmp.eq.s32.totalorder %s23, 11
    %p95 = scmp.ne.s32.totalorder %s90, %s92
    %p96 = scmp.eq.s32.totalorder %s23, 0
    %p97 = por %p95, %p96
    %p98 = scmp.ne.s32.totalorder %s90, %s92
    %p99 = scmp.eq.s32.totalorder %s28, 11
    %p100 = por %p98, %p99
    %p101 = scmp.ne.s32.totalorder %s92, %s93
    %p102 = scmp.eq.s32.totalorder %s28, 0
    %p103 = por %p101, %p102
    %p104 = scmp.ne.s32.totalorder %s92, %s93
    %p105 = scmp.eq.s32.totalorder %s29, 11
    %p106 = por %p104, %p105
    %p108 = scmp.ne.s32.totalorder %s93, %s107
    %p109 = scmp.eq.s32.totalorder %s29, 0
    %p110 = por %p108, %p109
    %s112 = sadd.s32 %s111, 1
    %p115 = scmp.eq.s32.totalorder %s23, 11
    %p116 = scmp.ne.s32.totalorder %s111, %s113
    %p117 = scmp.eq.s32.totalorder %s23, 0
    %p118 = por %p116, %p117
    %p119 = scmp.ne.s32.totalorder %s111, %s113
    %p120 = scmp.eq.s32.totalorder %s28, 11
    %p121 = por %p119, %p120
    %p122 = scmp.ne.s32.totalorder %s113, %s114
    %p123 = scmp.eq.s32.totalorder %s28, 0
    %p124 = por %p122, %p123
    %p125 = scmp.ne.s32.totalorder %s113, %s114
    %p126 = scmp.eq.s32.totalorder %s29, 11
    %p127 = por %p125, %p126
    %p129 = scmp.ne.s32.totalorder %s114, %s128
    %p130 = scmp.eq.s32.totalorder %s29, 0
    %p131 = por %p129, %p130
    %s133 = sadd.s32 %s132, 1
    %p136 = scmp.eq.s32.totalorder %s23, 11
    %p137 = scmp.ne.s32.totalorder %s132, %s134
    %p138 = scmp.eq.s32.totalorder %s23, 0
    %p139 = por %p137, %p138
    %p140 = scmp.ne.s32.totalorder %s132, %s134
    %p141 = scmp.eq.s32.totalorder %s28, 11
    %p142 = por %p140, %p141
    %p143 = scmp.ne.s32.totalorder %s134, %s135
    %p144 = scmp.eq.s32.totalorder %s28, 0
    %p145 = por %p143, %p144
    %p146 = scmp.ne.s32.totalorder %s134, %s135
    %p147 = scmp.eq.s32.totalorder %s29, 11
    %p148 = por %p146, %p147
    %p150 = scmp.ne.s32.totalorder %s135, %s149
    %p151 = scmp.eq.s32.totalorder %s29, 0
    %p152 = por %p150, %p151
    %s153 = ssub.s32 %s31, %s38
    %p154 = scmp.eq.s32.totalorder %s153, 0
    %s156 = sadd.s32 %s155, 1
    %s157 = scalar_select %p154, %s155, %s156
    %p160 = pneg %p154
    %p161 = scmp.eq.s32.totalorder %s23, 11
    %p162 = por %p160, %p161
    %p163 = scmp.ne.s32.totalorder %s155, %s158
    %p164 = scmp.eq.s32.totalorder %s23, 0
    %p165 = por %p163, %p164
    %p166 = scmp.ne.s32.totalorder %s155, %s158
    %p167 = scmp.eq.s32.totalorder %s28, 11
    %p168 = por %p166, %p167
    %p169 = scmp.ne.s32.totalorder %s158, %s159
    %p170 = scmp.eq.s32.totalorder %s28, 0
    %p171 = por %p169, %p170
    %p172 = scmp.ne.s32.totalorder %s158, %s159
    %p173 = scmp.eq.s32.totalorder %s29, 11
    %p174 = por %p172, %p173
    %p176 = scmp.ne.s32.totalorder %s159, %s175
    %p177 = scmp.eq.s32.totalorder %s29, 0
    %p178 = por %p176, %p177
    %s179 = ssub.s32 %s31, %s38
    %p180 = scmp.eq.s32.totalorder %s179, 0
    %s182 = sadd.s32 %s181, 1
    %s183 = scalar_select %p180, %s181, %s182
    %p186 = pneg %p180
    %p187 = scmp.eq.s32.totalorder %s23, 11
    %p188 = por %p186, %p187
    %p189 = scmp.ne.s32.totalorder %s181, %s184
    %p190 = scmp.eq.s32.totalorder %s23, 0
    %p191 = por %p189, %p190
    %p192 = scmp.ne.s32.totalorder %s181, %s184
    %p193 = scmp.eq.s32.totalorder %s28, 11
    %p194 = por %p192, %p193
    %p195 = scmp.ne.s32.totalorder %s184, %s185
    %p196 = scmp.eq.s32.totalorder %s28, 0
    %p197 = por %p195, %p196
    %p198 = scmp.ne.s32.totalorder %s184, %s185
    %p199 = scmp.eq.s32.totalorder %s29, 11
    %p200 = por %p198, %p199
    %p202 = scmp.ne.s32.totalorder %s185, %s201
    %p203 = scmp.eq.s32.totalorder %s29, 0
    %p204 = por %p202, %p203
    %s205 = ssub.s32 %s31, %s38
    %p206 = scmp.eq.s32.totalorder %s205, 0
    %s208 = sadd.s32 %s207, 1
    %s209 = scalar_select %p206, %s207, %s208
    %p212 = pneg %p206
    %p213 = scmp.eq.s32.totalorder %s23, 11
    %p214 = por %p212, %p213
    %p215 = scmp.ne.s32.totalorder %s207, %s210
    %p216 = scmp.eq.s32.totalorder %s23, 0
    %p217 = por %p215, %p216
    %p218 = scmp.ne.s32.totalorder %s207, %s210
    %p219 = scmp.eq.s32.totalorder %s28, 11
    %p220 = por %p218, %p219
    %p221 = scmp.ne.s32.totalorder %s210, %s211
    %p222 = scmp.eq.s32.totalorder %s28, 0
    %p223 = por %p221, %p222
    %p224 = scmp.ne.s32.totalorder %s210, %s211
    %p225 = scmp.eq.s32.totalorder %s29, 11
    %p226 = por %p224, %p225
    %p228 = scmp.ne.s32.totalorder %s211, %s227
    %p229 = scmp.eq.s32.totalorder %s29, 0
    %p230 = por %p228, %p229
    %s231 = ssub.s32 %s31, %s38
    %p232 = scmp.eq.s32.totalorder %s231, 0
    %s234 = sadd.s32 %s233, 1
    %s235 = scalar_select %p232, %s233, %s234
    %p238 = pneg %p232
    %p239 = scmp.eq.s32.totalorder %s23, 11
    %p240 = por %p238, %p239
    %p241 = scmp.ne.s32.totalorder %s233, %s236
    %p242 = scmp.eq.s32.totalorder %s23, 0
    %p243 = por %p241, %p242
    %p244 = scmp.ne.s32.totalorder %s233, %s236
    %p245 = scmp.eq.s32.totalorder %s28, 11
    %p246 = por %p244, %p245
    %p247 = scmp.ne.s32.totalorder %s236, %s237
    %p248 = scmp.eq.s32.totalorder %s28, 0
    %p249 = por %p247, %p248
    %p250 = scmp.ne.s32.totalorder %s236, %s237
    %p251 = scmp.eq.s32.totalorder %s29, 11
    %p252 = por %p250, %p251
    %p254 = scmp.ne.s32.totalorder %s237, %s253
    %p255 = scmp.eq.s32.totalorder %s29, 0
    %p256 = por %p254, %p255
    %s257 = ssub.s32 %s31, %s38
    %p258 = scmp.eq.s32.totalorder %s257, 0
    %s260 = sadd.s32 %s259, 1
    %s261 = scalar_select %p258, %s259, %s260
    %p264 = pneg %p258
    %p265 = scmp.eq.s32.totalorder %s23, 11
    %p266 = por %p264, %p265
    %p267 = scmp.ne.s32.totalorder %s259, %s262
    %p268 = scmp.eq.s32.totalorder %s23, 0
    %p269 = por %p267, %p268
    %p270 = scmp.ne.s32.totalorder %s259, %s262
    %p271 = scmp.eq.s32.totalorder %s28, 11
    %p272 = por %p270, %p271
    %p273 = scmp.ne.s32.totalorder %s262, %s263
    %p274 = scmp.eq.s32.totalorder %s28, 0
    %p275 = por %p273, %p274
    %p276 = scmp.ne.s32.totalorder %s262, %s263
    %p277 = scmp.eq.s32.totalorder %s29, 11
    %p278 = por %p276, %p277
    %p280 = scmp.ne.s32.totalorder %s263, %s279
    %p281 = scmp.eq.s32.totalorder %s29, 0
    %p282 = por %p280, %p281
    %s283 = ssub.s32 %s31, %s38
    %p284 = scmp.eq.s32.totalorder %s283, 0
    %s286 = sadd.s32 %s285, 1
    %s287 = scalar_select %p284, %s285, %s286
    %p290 = pneg %p284
    %p291 = scmp.eq.s32.totalorder %s23, 11
    %p292 = por %p290, %p291
    %p293 = scmp.ne.s32.totalorder %s285, %s288
    %p294 = scmp.eq.s32.totalorder %s23, 0
    %p295 = por %p293, %p294
    %p296 = scmp.ne.s32.totalorder %s285, %s288
    %p297 = scmp.eq.s32.totalorder %s28, 11
    %p298 = por %p296, %p297
    %p299 = scmp.ne.s32.totalorder %s288, %s289
    %p300 = scmp.eq.s32.totalorder %s28, 0
    %p301 = por %p299, %p300
    %p302 = scmp.ne.s32.totalorder %s288, %s289
    %p303 = scmp.eq.s32.totalorder %s29, 11
    %p304 = por %p302, %p303
    %p306 = scmp.ne.s32.totalorder %s289, %s305
    %p307 = scmp.eq.s32.totalorder %s29, 0
    %p308 = por %p306, %p307
    %s309 = ssub.s32 %s31, %s38
    %p310 = scmp.eq.s32.totalorder %s309, 0
    %s312 = sadd.s32 %s311, 1
    %s313 = scalar_select %p310, %s311, %s312
    %p316 = pneg %p310
    %p317 = scmp.eq.s32.totalorder %s23, 11
    %p318 = por %p316, %p317
    %p319 = scmp.ne.s32.totalorder %s311, %s314
    %p320 = scmp.eq.s32.totalorder %s23, 0
    %p321 = por %p319, %p320
    %p322 = scmp.ne.s32.totalorder %s311, %s314
    %p323 = scmp.eq.s32.totalorder %s28, 11
    %p324 = por %p322, %p323
    %p325 = scmp.ne.s32.totalorder %s314, %s315
    %p326 = scmp.eq.s32.totalorder %s28, 0
    %p327 = por %p325, %p326
    %p328 = scmp.ne.s32.totalorder %s314, %s315
    %p329 = scmp.eq.s32.totalorder %s29, 11
    %p330 = por %p328, %p329
    %p332 = scmp.ne.s32.totalorder %s315, %s331
    %p333 = scmp.eq.s32.totalorder %s29, 0
    %p334 = por %p332, %p333
    %s335 = ssub.s32 %s31, %s38
    %p336 = scmp.eq.s32.totalorder %s335, 0
    %s338 = sadd.s32 %s337, 1
    %s339 = scalar_select %p336, %s337, %s338
    %p342 = pneg %p336
    %p343 = scmp.eq.s32.totalorder %s23, 11
    %p344 = por %p342, %p343
    %p345 = scmp.ne.s32.totalorder %s337, %s340
    %p346 = scmp.eq.s32.totalorder %s23, 0
    %p347 = por %p345, %p346
    %p348 = scmp.ne.s32.totalorder %s337, %s340
    %p349 = scmp.eq.s32.totalorder %s28, 11
    %p350 = por %p348, %p349
    %p351 = scmp.ne.s32.totalorder %s340, %s341
    %p352 = scmp.eq.s32.totalorder %s28, 0
    %p353 = por %p351, %p352
    %p354 = scmp.ne.s32.totalorder %s340, %s341
    %p355 = scmp.eq.s32.totalorder %s29, 11
    %p356 = por %p354, %p355
    %p358 = scmp.ne.s32.totalorder %s341, %s357
    %p359 = scmp.eq.s32.totalorder %s29, 0
    %p360 = por %p358, %p359
    %s361 = ssub.s32 %s31, %s38
    %p362 = scmp.eq.s32.totalorder %s361, 0
    %s364 = sadd.s32 %s363, 1
    %s365 = scalar_select %p362, %s363, %s364
    %p368 = pneg %p362
    %p369 = scmp.eq.s32.totalorder %s23, 11
    %p370 = por %p368, %p369
    %p371 = scmp.ne.s32.totalorder %s363, %s366
    %p372 = scmp.eq.s32.totalorder %s23, 0
    %p373 = por %p371, %p372
    %p374 = scmp.ne.s32.totalorder %s363, %s366
    %p375 = scmp.eq.s32.totalorder %s28, 11
    %p376 = por %p374, %p375
    %p377 = scmp.ne.s32.totalorder %s366, %s367
    %p378 = scmp.eq.s32.totalorder %s28, 0
    %p379 = por %p377, %p378
    %p380 = scmp.ne.s32.totalorder %s366, %s367
    %p381 = scmp.eq.s32.totalorder %s29, 11
    %p382 = por %p380, %p381
    %p384 = scmp.ne.s32.totalorder %s367, %s383
    %p385 = scmp.eq.s32.totalorder %s29, 0
    %p386 = por %p384, %p385
    %s387 = ssub.s32 %s31, %s38
    %p388 = scmp.eq.s32.totalorder %s387, 0
    %s390 = sadd.s32 %s389, 1
    %s391 = scalar_select %p388, %s389, %s390
    %p394 = pneg %p388
    %p395 = scmp.eq.s32.totalorder %s23, 11
    %p396 = por %p394, %p395
    %p397 = scmp.ne.s32.totalorder %s389, %s392
    %p398 = scmp.eq.s32.totalorder %s23, 0
    %p399 = por %p397, %p398
    %p400 = scmp.ne.s32.totalorder %s389, %s392
    %p401 = scmp.eq.s32.totalorder %s28, 11
    %p402 = por %p400, %p401
    %p403 = scmp.ne.s32.totalorder %s392, %s393
    %p404 = scmp.eq.s32.totalorder %s28, 0
    %p405 = por %p403, %p404
    %p406 = scmp.ne.s32.totalorder %s392, %s393
    %p407 = scmp.eq.s32.totalorder %s29, 11
    %p408 = por %p406, %p407
    %p410 = scmp.ne.s32.totalorder %s393, %s409
    %p411 = scmp.eq.s32.totalorder %s29, 0
    %p412 = por %p410, %p411
    %s413 = ssub.s32 %s31, %s38
    %p414 = scmp.eq.s32.totalorder %s413, 0
    %s416 = sadd.s32 %s415, 1
    %s417 = scalar_select %p414, %s415, %s416
    %p420 = pneg %p414
    %p421 = scmp.eq.s32.totalorder %s23, 11
    %p422 = por %p420, %p421
    %p423 = scmp.ne.s32.totalorder %s415, %s418
    %p424 = scmp.eq.s32.totalorder %s23, 0
    %p425 = por %p423, %p424
    %p426 = scmp.ne.s32.totalorder %s415, %s418
    %p427 = scmp.eq.s32.totalorder %s28, 11
    %p428 = por %p426, %p427
    %p429 = scmp.ne.s32.totalorder %s418, %s419
    %p430 = scmp.eq.s32.totalorder %s28, 0
    %p431 = por %p429, %p430
    %p432 = scmp.ne.s32.totalorder %s418, %s419
    %p433 = scmp.eq.s32.totalorder %s29, 11
    %p434 = por %p432, %p433
    %p436 = scmp.ne.s32.totalorder %s419, %s435
    %p437 = scmp.eq.s32.totalorder %s29, 0
    %p438 = por %p436, %p437
    %s439 = ssub.s32 %s31, %s38
    %p440 = scmp.eq.s32.totalorder %s439, 0
    %s442 = sadd.s32 %s441, 1
    %s443 = scalar_select %p440, %s441, %s442
    %p446 = pneg %p440
    %p447 = scmp.eq.s32.totalorder %s23, 11
    %p448 = por %p446, %p447
    %p449 = scmp.ne.s32.totalorder %s441, %s444
    %p450 = scmp.eq.s32.totalorder %s23, 0
    %p451 = por %p449, %p450
    %p452 = scmp.ne.s32.totalorder %s441, %s444
    %p453 = scmp.eq.s32.totalorder %s28, 11
    %p454 = por %p452, %p453
    %p455 = scmp.ne.s32.totalorder %s444, %s445
    %p456 = scmp.eq.s32.totalorder %s28, 0
    %p457 = por %p455, %p456
    %p458 = scmp.ne.s32.totalorder %s444, %s445
    %p459 = scmp.eq.s32.totalorder %s29, 11
    %p460 = por %p458, %p459
    %p462 = scmp.ne.s32.totalorder %s445, %s461
    %p463 = scmp.eq.s32.totalorder %s29, 0
    %p464 = por %p462, %p463
    %s465 = ssub.s32 %s30, %s42
    %p466 = scmp.eq.s32.totalorder %s465, 0
    %s468 = sadd.s32 %s467, 1
    %s469 = scalar_select %p466, %s467, %s468
    %p472 = pneg %p466
    %p473 = scmp.eq.s32.totalorder %s23, 11
    %p474 = por %p472, %p473
    %p475 = scmp.ne.s32.totalorder %s467, %s470
    %p476 = scmp.eq.s32.totalorder %s23, 0
    %p477 = por %p475, %p476
    %p478 = scmp.ne.s32.totalorder %s467, %s470
    %p479 = scmp.eq.s32.totalorder %s28, 11
    %p480 = por %p478, %p479
    %p481 = scmp.ne.s32.totalorder %s470, %s471
    %p482 = scmp.eq.s32.totalorder %s28, 0
    %p483 = por %p481, %p482
    %p484 = scmp.ne.s32.totalorder %s470, %s471
    %p485 = scmp.eq.s32.totalorder %s29, 11
    %p486 = por %p484, %p485
    %p488 = scmp.ne.s32.totalorder %s471, %s487
    %p489 = scmp.eq.s32.totalorder %s29, 0
    %p490 = por %p488, %p489
    %p491 = scmp.le.s32.totalorder 1, %s23
    %p492 = scmp.lt.s32.totalorder %s23, 13
    %p493 = pnand %p491, %p492
    %p494 = pneg %p493
    // Predicated region
    $region9: #{tpu_custom_call.1} parent=5 // pred_check
      _
    $region10: #{tpu_custom_call.1} parent=5 // pred_check_branch
      %496 = sbr.rel (%p493) target = $region12
    $region11: #{tpu_custom_call.1} parent=5 // pred_region
      %s497 = ssub.s32 %s23, 1
      // Predicated region
      $region13: #{tpu_custom_call.1} parent=11 // pred_check
        %p498 = pneg %p61
      $region14: #{tpu_custom_call.1} parent=11 // pred_check_branch
        %500 = sbr.rel (%p498) target = $region16
      $region15: #{tpu_custom_call.1} parent=11 // pred_region
        %p501 = scmp.lt.s32.totalorder %s32, 0
        %s502 = scalar_select %p501, %s32, 0
        %s503 = smul.addr %s502, 6
        %s504 = smul.addr %s503, 4
        %s505 = scalar_lea.vmem %s0, %s504
      $region16: #{tpu_custom_call.1} parent=11 // pred_fallthru
        _
      // Predicated region
      $region17: #{tpu_custom_call.1} parent=11 // pred_check
        %p506 = pneg %p82
      $region18: #{tpu_custom_call.1} parent=11 // pred_check_branch
        %508 = sbr.rel (%p506) target = $region20
      $region19: #{tpu_custom_call.1} parent=11 // pred_region
        _
      $region20: #{tpu_custom_call.1} parent=11 // pred_fallthru
        _
      // Predicated region
      $region21: #{tpu_custom_call.1} parent=11 // pred_check
        %p509 = pneg %p103
      $region22: #{tpu_custom_call.1} parent=11 // pred_check_branch
        %511 = sbr.rel (%p509) target = $region24
      $region23: #{tpu_custom_call.1} parent=11 // pred_region
        _
      $region24: #{tpu_custom_call.1} parent=11 // pred_fallthru
        _
      // Predicated region
      $region25: #{tpu_custom_call.1} parent=11 // pred_check
        %p512 = pneg %p124
      $region26: #{tpu_custom_call.1} parent=11 // pred_check_branch
        %514 = sbr.rel (%p512) target = $region28
      $region27: #{tpu_custom_call.1} parent=11 // pred_region
        _
      $region28: #{tpu_custom_call.1} parent=11 // pred_fallthru
        _
      // Predicated region
      $region29: #{tpu_custom_call.1} parent=11 // pred_check
        %p515 = pneg %p145
      $region30: #{tpu_custom_call.1} parent=11 // pred_check_branch
        %517 = sbr.rel (%p515) target = $region32
      $region31: #{tpu_custom_call.1} parent=11 // pred_region
        _
      $region32: #{tpu_custom_call.1} parent=11 // pred_fallthru
        _
    $region12: #{tpu_custom_call.1} parent=5 // pred_fallthru
      _
    %p518 = scmp.lt.s32.totalorder %s23, 12
    // Predicated region
    $region33: #{tpu_custom_call.1} parent=5 // pred_check
      %p519 = pneg %p518
    $region34: #{tpu_custom_call.1} parent=5 // pred_check_branch
      %521 = sbr.rel (%p519) target = $region36
    $region35: #{tpu_custom_call.1} parent=5 // pred_region
      // Predicated region
      $region37: #{tpu_custom_call.1} parent=35 // pred_check
        %p522 = pneg %p165
      $region38: #{tpu_custom_call.1} parent=35 // pred_check_branch
        %524 = sbr.rel (%p522) target = $region40
      $region39: #{tpu_custom_call.1} parent=35 // pred_region
        %p525 = scmp.lt.s32.totalorder %s31, 11
        %s526 = scalar_select %p525, %s31, 11
        %s527 = scalar_lea.vmem %s5, %s526
      $region40: #{tpu_custom_call.1} parent=35 // pred_fallthru
        _
      // Predicated region
      $region41: #{tpu_custom_call.1} parent=35 // pred_check
        %p528 = pneg %p191
      $region42: #{tpu_custom_call.1} parent=35 // pred_check_branch
        %530 = sbr.rel (%p528) target = $region44
      $region43: #{tpu_custom_call.1} parent=35 // pred_region
        %p531 = scmp.lt.s32.totalorder %s31, 11
        %s532 = scalar_select %p531, %s31, 11
        %s533 = scalar_lea.vmem %s6, %s532
      $region44: #{tpu_custom_call.1} parent=35 // pred_fallthru
        _
      // Predicated region
      $region45: #{tpu_custom_call.1} parent=35 // pred_check
        %p534 = pneg %p217
      $region46: #{tpu_custom_call.1} parent=35 // pred_check_branch
        %536 = sbr.rel (%p534) target = $region48
      $region47: #{tpu_custom_call.1} parent=35 // pred_region
        %p537 = scmp.lt.s32.totalorder %s31, 11
        %s538 = scalar_select %p537, %s31, 11
        %s539 = smul.addr %s538, 4
        %s540 = smul.addr %s539, 4
        %s541 = scalar_lea.vmem %s7, %s540
      $region48: #{tpu_custom_call.1} parent=35 // pred_fallthru
        _
      // Predicated region
      $region49: #{tpu_custom_call.1} parent=35 // pred_check
        %p542 = pneg %p243
      $region50: #{tpu_custom_call.1} parent=35 // pred_check_branch
        %544 = sbr.rel (%p542) target = $region52
      $region51: #{tpu_custom_call.1} parent=35 // pred_region
        %p545 = scmp.lt.s32.totalorder %s31, 11
        %s546 = scalar_select %p545, %s31, 11
        %s547 = scalar_lea.vmem %s8, %s546
      $region52: #{tpu_custom_call.1} parent=35 // pred_fallthru
        _
      // Predicated region
      $region53: #{tpu_custom_call.1} parent=35 // pred_check
        %p548 = pneg %p269
      $region54: #{tpu_custom_call.1} parent=35 // pred_check_branch
        %550 = sbr.rel (%p548) target = $region56
      $region55: #{tpu_custom_call.1} parent=35 // pred_region
        %p551 = scmp.lt.s32.totalorder %s31, 11
        %s552 = scalar_select %p551, %s31, 11
        %s553 = smul.addr %s552, 4
        %s554 = smul.addr %s553, 4
        %s555 = scalar_lea.vmem %s9, %s554
      $region56: #{tpu_custom_call.1} parent=35 // pred_fallthru
        _
      // Predicated region
      $region57: #{tpu_custom_call.1} parent=35 // pred_check
        %p556 = pneg %p295
      $region58: #{tpu_custom_call.1} parent=35 // pred_check_branch
        %558 = sbr.rel (%p556) target = $region60
      $region59: #{tpu_custom_call.1} parent=35 // pred_region
        %p559 = scmp.lt.s32.totalorder %s31, 11
        %s560 = scalar_select %p559, %s31, 11
        %s561 = scalar_lea.vmem %s10, %s560
      $region60: #{tpu_custom_call.1} parent=35 // pred_fallthru
        _
      // Predicated region
      $region61: #{tpu_custom_call.1} parent=35 // pred_check
        %p562 = pneg %p321
      $region62: #{tpu_custom_call.1} parent=35 // pred_check_branch
        %564 = sbr.rel (%p562) target = $region64
      $region63: #{tpu_custom_call.1} parent=35 // pred_region
        %p565 = scmp.lt.s32.totalorder %s31, 11
        %s566 = scalar_select %p565, %s31, 11
        %s567 = scalar_lea.vmem %s11, %s566
      $region64: #{tpu_custom_call.1} parent=35 // pred_fallthru
        _
      // Predicated region
      $region65: #{tpu_custom_call.1} parent=35 // pred_check
        %p568 = pneg %p347
      $region66: #{tpu_custom_call.1} parent=35 // pred_check_branch
        %570 = sbr.rel (%p568) target = $region68
      $region67: #{tpu_custom_call.1} parent=35 // pred_region
        %p571 = scmp.lt.s32.totalorder %s31, 11
        %s572 = scalar_select %p571, %s31, 11
        %s573 = scalar_lea.vmem %s12, %s572
      $region68: #{tpu_custom_call.1} parent=35 // pred_fallthru
        _
      // Predicated region
      $region69: #{tpu_custom_call.1} parent=35 // pred_check
        %p574 = pneg %p373
      $region70: #{tpu_custom_call.1} parent=35 // pred_check_branch
        %576 = sbr.rel (%p574) target = $region72
      $region71: #{tpu_custom_call.1} parent=35 // pred_region
        %p577 = scmp.lt.s32.totalorder %s31, 11
        %s578 = scalar_select %p577, %s31, 11
        %s579 = smul.addr %s578, 4
        %s580 = smul.addr %s579, 4
        %s581 = scalar_lea.vmem %s13, %s580
      $region72: #{tpu_custom_call.1} parent=35 // pred_fallthru
        _
      // Predicated region
      $region73: #{tpu_custom_call.1} parent=35 // pred_check
        %p582 = pneg %p399
      $region74: #{tpu_custom_call.1} parent=35 // pred_check_branch
        %584 = sbr.rel (%p582) target = $region76
      $region75: #{tpu_custom_call.1} parent=35 // pred_region
        %p585 = scmp.lt.s32.totalorder %s31, 11
        %s586 = scalar_select %p585, %s31, 11
        %s587 = scalar_lea.vmem %s14, %s586
      $region76: #{tpu_custom_call.1} parent=35 // pred_fallthru
        _
      // Predicated region
      $region77: #{tpu_custom_call.1} parent=35 // pred_check
        %p588 = pneg %p425
      $region78: #{tpu_custom_call.1} parent=35 // pred_check_branch
        %590 = sbr.rel (%p588) target = $region80
      $region79: #{tpu_custom_call.1} parent=35 // pred_region
        %p591 = scmp.lt.s32.totalorder %s31, 11
        %s592 = scalar_select %p591, %s31, 11
        %s593 = smul.addr %s592, 16
        %s594 = smul.addr %s593, 4
        %s595 = scalar_lea.vmem %s15, %s594
      $region80: #{tpu_custom_call.1} parent=35 // pred_fallthru
        _
      // Predicated region
      $region81: #{tpu_custom_call.1} parent=35 // pred_check
        %p596 = pneg %p451
      $region82: #{tpu_custom_call.1} parent=35 // pred_check_branch
        %598 = sbr.rel (%p596) target = $region84
      $region83: #{tpu_custom_call.1} parent=35 // pred_region
        %p599 = scmp.lt.s32.totalorder %s31, 11
        %s600 = scalar_select %p599, %s31, 11
        %s601 = scalar_lea.vmem %s16, %s600
      $region84: #{tpu_custom_call.1} parent=35 // pred_fallthru
        _
    $region36: #{tpu_custom_call.1} parent=5 // pred_fallthru
      _
    %p602 = scmp.le.s32.totalorder 1, %s23
    %p603 = scmp.lt.s32.totalorder %s23, 13
    %p604 = pnand %p602, %p603
    %p605 = pneg %p604
    // Predicated region
    $region85: #{tpu_custom_call.1} parent=5 // pred_check
      _
    $region86: #{tpu_custom_call.1} parent=5 // pred_check_branch
      %607 = sbr.rel (%p604) target = $region88
    $region87: #{tpu_custom_call.1} parent=5 // pred_region
      %s608 = ssub.s32 %s23, 1
      %p609 = scmp.lt.s32.totalorder %s32, 0
      %s610 = scalar_select %p609, %s32, 0
      %s611 = smul.addr %s610, 6
      %s612 = smul.addr %s611, 4
      %s613 = scalar_lea.vmem %s0, %s612
      %p614 = pneg %p61
      %p615 = pneg %p58
      %p616 = pneg %p82
      %p617 = pneg %p79
      %p618 = pneg %p103
      %p619 = pneg %p100
      %p620 = pneg %p124
      %p621 = pneg %p121
      %p622 = pneg %p145
      %p623 = pneg %p142
      %p624 = scmp.lt.s32.totalorder %s33, 11
      %s625 = scalar_select %p624, %s33, 11
      %s626 = scalar_lea.vmem %s5, %s625
      %p627 = pneg %p171
      %p628 = pneg %p168
      %p629 = scmp.lt.s32.totalorder %s33, 11
      %s630 = scalar_select %p629, %s33, 11
      %s631 = scalar_lea.vmem %s6, %s630
      %p632 = pneg %p197
      %p633 = pneg %p194
      %p634 = scmp.lt.s32.totalorder %s33, 11
      %s635 = scalar_select %p634, %s33, 11
      %s636 = smul.addr %s635, 4
      %s637 = smul.addr %s636, 4
      %s638 = scalar_lea.vmem %s7, %s637
      %p639 = pneg %p223
      %p640 = pneg %p220
      %p641 = scmp.lt.s32.totalorder %s33, 11
      %s642 = scalar_select %p641, %s33, 11
      %s643 = scalar_lea.vmem %s8, %s642
      %p644 = pneg %p249
      %p645 = pneg %p246
      %p646 = scmp.lt.s32.totalorder %s33, 11
      %s647 = scalar_select %p646, %s33, 11
      %s648 = smul.addr %s647, 4
      %s649 = smul.addr %s648, 4
      %s650 = scalar_lea.vmem %s9, %s649
      %p651 = pneg %p275
      %p652 = pneg %p272
      %p653 = scmp.lt.s32.totalorder %s33, 11
      %s654 = scalar_select %p653, %s33, 11
      %s655 = scalar_lea.vmem %s10, %s654
      %p656 = pneg %p301
      %p657 = pneg %p298
      %p658 = scmp.lt.s32.totalorder %s33, 11
      %s659 = scalar_select %p658, %s33, 11
      %s660 = scalar_lea.vmem %s11, %s659
      %p661 = pneg %p327
      %p662 = pneg %p324
      %p663 = scmp.lt.s32.totalorder %s33, 11
      %s664 = scalar_select %p663, %s33, 11
      %s665 = scalar_lea.vmem %s12, %s664
      %p666 = pneg %p353
      %p667 = pneg %p350
      %p668 = scmp.lt.s32.totalorder %s33, 11
      %s669 = scalar_select %p668, %s33, 11
      %s670 = smul.addr %s669, 4
      %s671 = smul.addr %s670, 4
      %s672 = scalar_lea.vmem %s13, %s671
      %p673 = pneg %p379
      %p674 = pneg %p376
      %p675 = scmp.lt.s32.totalorder %s33, 11
      %s676 = scalar_select %p675, %s33, 11
      %s677 = scalar_lea.vmem %s14, %s676
      %p678 = pneg %p405
      %p679 = pneg %p402
      %p680 = scmp.lt.s32.totalorder %s33, 11
      %s681 = scalar_select %p680, %s33, 11
      %s682 = smul.addr %s681, 16
      %s683 = smul.addr %s682, 4
      %s684 = scalar_lea.vmem %s15, %s683
      %p685 = pneg %p431
      %p686 = pneg %p428
      %p687 = scmp.lt.s32.totalorder %s33, 11
      %s688 = scalar_select %p687, %s33, 11
      %s689 = scalar_lea.vmem %s16, %s688
      %p690 = pneg %p457
      %p691 = pneg %p454
      %p692 = pneg %p483
      %p693 = pneg %p480
      %s694 = smul.u32 2, %s32
      %p695 = scmp.lt.s32.totalorder %s694, 1
      %s696 = scalar_select %p695, %s694, 1
      %s697 = smul.addr %s696, 8
      %s698 = scalar_lea.vmem %s17, %s697
      %p699 = scmp.lt.s32.totalorder %s32, 0
      %s700 = scalar_select %p699, %s32, 0
      %s701 = smul.addr %s700, 6
      %s702 = smul.addr %s701, 4
      %s703 = scalar_lea.vmem %s0, %s702
      %p704 = scmp.lt.s32.totalorder %s33, 11
      %s705 = scalar_select %p704, %s33, 11
      %s706 = scalar_lea.vmem %s5, %s705
      %p707 = scmp.lt.s32.totalorder %s33, 11
      %s708 = scalar_select %p707, %s33, 11
      %s709 = scalar_lea.vmem %s6, %s708
      %p710 = scmp.lt.s32.totalorder %s33, 11
      %s711 = scalar_select %p710, %s33, 11
      %s712 = smul.addr %s711, 4
      %s713 = smul.addr %s712, 4
      %s714 = scalar_lea.vmem %s7, %s713
      %p715 = scmp.lt.s32.totalorder %s33, 11
      %s716 = scalar_select %p715, %s33, 11
      %s717 = scalar_lea.vmem %s8, %s716
      %p718 = scmp.lt.s32.totalorder %s33, 11
      %s719 = scalar_select %p718, %s33, 11
      %s720 = smul.addr %s719, 4
      %s721 = smul.addr %s720, 4
      %s722 = scalar_lea.vmem %s9, %s721
      %p723 = scmp.lt.s32.totalorder %s33, 11
      %s724 = scalar_select %p723, %s33, 11
      %s725 = scalar_lea.vmem %s10, %s724
      %p726 = scmp.lt.s32.totalorder %s33, 11
      %s727 = scalar_select %p726, %s33, 11
      %s728 = scalar_lea.vmem %s11, %s727
      %p729 = scmp.lt.s32.totalorder %s33, 11
      %s730 = scalar_select %p729, %s33, 11
      %s731 = scalar_lea.vmem %s12, %s730
      %p732 = scmp.lt.s32.totalorder %s33, 11
      %s733 = scalar_select %p732, %s33, 11
      %s734 = smul.addr %s733, 4
      %s735 = smul.addr %s734, 4
      %s736 = scalar_lea.vmem %s13, %s735
      %p737 = scmp.lt.s32.totalorder %s33, 11
      %s738 = scalar_select %p737, %s33, 11
      %s739 = scalar_lea.vmem %s14, %s738
      %p740 = scmp.lt.s32.totalorder %s33, 11
      %s741 = scalar_select %p740, %s33, 11
      %s742 = smul.addr %s741, 16
      %s743 = smul.addr %s742, 4
      %s744 = scalar_lea.vmem %s15, %s743
      %p745 = scmp.lt.s32.totalorder %s33, 11
      %s746 = scalar_select %p745, %s33, 11
      %s747 = scalar_lea.vmem %s16, %s746
      %s748 = smul.u32 2, %s32
      %p749 = scmp.lt.s32.totalorder %s748, 1
      %s750 = scalar_select %p749, %s748, 1
      %s751 = smul.addr %s750, 8
      %s752 = scalar_lea.vmem %s17, %s751
      %s753 = smul.u32 2, %s32
      %p755 = scmp.eq.s32.totalorder %s33, 0
      // Predicated region
      $region89: #{tpu_custom_call.1} parent=87 // pred_check
        %p756 = pneg %p755
      $region90: #{tpu_custom_call.1} parent=87 // pred_check_branch
        %758 = sbr.rel (%p756) target = $region92
      $region91: #{tpu_custom_call.1} parent=87 // pred_region
        %v759 = vld [vmem:[%s703] sm:$0xff]
        %v760 = vld [vmem:[%s703 + $0x8] sm:$0xff]
        %v761 = vld [vmem:[%s703 + $0x10] sm:$0xff]
        %v762 = vld [vmem:[%s1] sm:$0xf]
        %v763 = vld [vmem:[%s1 + $0x4] sm:$0xf]
        %v764 = vld [vmem:[%s1 + $0x8] sm:$0xf]
        %v765 = vld [vmem:[%s1 + $0xc] sm:$0xf]
        %v766 = vld [vmem:[%s1 + $0x10] sm:$0xf]
        %v767 = vld [vmem:[%s1 + $0x14] sm:$0xf]
        %v768 = vld [vmem:[%s1 + $0x18] sm:$0xf]
        %v769 = vld [vmem:[%s1 + $0x1c] sm:$0xf]
        %v770 = vld [vmem:[%s1 + $0x20] sm:$0xf]
        %v771 = vld [vmem:[%s1 + $0x24] sm:$0xf]
        %v772 = vld [vmem:[%s1 + $0x28] sm:$0xf]
        %v773 = vld [vmem:[%s1 + $0x2c] sm:$0xf]
        %v774 = vld [vmem:[%s1 + $0x30] sm:$0xf]
        %v775 = vld [vmem:[%s1 + $0x34] sm:$0xf]
        %v776 = vld [vmem:[%s1 + $0x38] sm:$0xf]
        %v777 = vld [vmem:[%s1 + $0x3c] sm:$0xf]
        %v778 = vld [vmem:[%s1 + $0x40] sm:$0xf]
        %v779 = vld [vmem:[%s1 + $0x44] sm:$0xf]
        %v780 = vld [vmem:[%s1 + $0x48] sm:$0xf]
        %v781 = vld [vmem:[%s1 + $0x4c] sm:$0xf]
        %v782 = vld [vmem:[%s1 + $0x50] sm:$0xf]
        %v783 = vld [vmem:[%s1 + $0x54] sm:$0xf]
        %v784 = vld [vmem:[%s1 + $0x58] sm:$0xf]
        %v785 = vld [vmem:[%s1 + $0x5c] sm:$0xf]
        %v786 = vld [vmem:[%s1 + $0x60] sm:$0xf]
        %v787 = vld [vmem:[%s1 + $0x64] sm:$0xf]
        %v788 = vld [vmem:[%s1 + $0x68] sm:$0xf]
        %v789 = vld [vmem:[%s1 + $0x6c] sm:$0xf]
        %v790 = vld [vmem:[%s1 + $0x70] sm:$0xf]
        %v791 = vld [vmem:[%s1 + $0x74] sm:$0xf]
        %v792 = vld [vmem:[%s1 + $0x78] sm:$0xf]
        %v793 = vld [vmem:[%s1 + $0x7c] sm:$0xf]
        %v794 = vld [vmem:[%s1 + $0x80] sm:$0xf]
        %v795 = vld [vmem:[%s1 + $0x84] sm:$0xf]
        %v796 = vld [vmem:[%s1 + $0x88] sm:$0xf]
        %v797 = vld [vmem:[%s1 + $0x8c] sm:$0xf]
        %v798 = vld [vmem:[%s1 + $0x90] sm:$0xf]
        %v799 = vld [vmem:[%s1 + $0x94] sm:$0xf]
        %v800 = vld [vmem:[%s1 + $0x98] sm:$0xf]
        %v801 = vld [vmem:[%s1 + $0x9c] sm:$0xf]
        %v802 = vld [vmem:[%s1 + $0xa0] sm:$0xf]
        %v803 = vld [vmem:[%s1 + $0xa4] sm:$0xf]
        %v804 = vld [vmem:[%s1 + $0xa8] sm:$0xf]
        %v805 = vld [vmem:[%s1 + $0xac] sm:$0xf]
        %v806 = vld [vmem:[%s1 + $0xb0] sm:$0xf]
        %v807 = vld [vmem:[%s1 + $0xb4] sm:$0xf]
        %v808 = vld [vmem:[%s1 + $0xb8] sm:$0xf]
        %v809 = vld [vmem:[%s1 + $0xbc] sm:$0xf]
        %v810 = vld [vmem:[%s1 + $0xc0] sm:$0xf]
        %v811 = vld [vmem:[%s1 + $0xc4] sm:$0xf]
        %v812 = vld [vmem:[%s1 + $0xc8] sm:$0xf]
        %v813 = vld [vmem:[%s1 + $0xcc] sm:$0xf]
        %v814 = vld [vmem:[%s1 + $0xd0] sm:$0xf]
        %v815 = vld [vmem:[%s1 + $0xd4] sm:$0xf]
        %v816 = vld [vmem:[%s1 + $0xd8] sm:$0xf]
        %v817 = vld [vmem:[%s1 + $0xdc] sm:$0xf]
        %v818 = vld [vmem:[%s1 + $0xe0] sm:$0xf]
        %v819 = vld [vmem:[%s1 + $0xe4] sm:$0xf]
        %v820 = vld [vmem:[%s1 + $0xe8] sm:$0xf]
        %v821 = vld [vmem:[%s1 + $0xec] sm:$0xf]
        %v822 = vld [vmem:[%s1 + $0xf0] sm:$0xf]
        %v823 = vld [vmem:[%s1 + $0xf4] sm:$0xf]
        %v824 = vld [vmem:[%s1 + $0xf8] sm:$0xf]
        %v825 = vld [vmem:[%s1 + $0xfc] sm:$0xf]
        %v826 = vld [vmem:[%s1 + $0x100] sm:$0xf]
        %v827 = vld [vmem:[%s1 + $0x104] sm:$0xf]
        %v828 = vld [vmem:[%s1 + $0x108] sm:$0xf]
        %v829 = vld [vmem:[%s1 + $0x10c] sm:$0xf]
        %v830 = vld [vmem:[%s1 + $0x110] sm:$0xf]
        %v831 = vld [vmem:[%s1 + $0x114] sm:$0xf]
        %v832 = vld [vmem:[%s1 + $0x118] sm:$0xf]
        %v833 = vld [vmem:[%s1 + $0x11c] sm:$0xf]
        %v834 = vld [vmem:[%s1 + $0x120] sm:$0xf]
        %v835 = vld [vmem:[%s1 + $0x124] sm:$0xf]
        %v836 = vld [vmem:[%s1 + $0x128] sm:$0xf]
        %v837 = vld [vmem:[%s1 + $0x12c] sm:$0xf]
        %v838 = vld [vmem:[%s1 + $0x130] sm:$0xf]
        %v839 = vld [vmem:[%s1 + $0x134] sm:$0xf]
        %v840 = vld [vmem:[%s1 + $0x138] sm:$0xf]
        %v841 = vld [vmem:[%s1 + $0x13c] sm:$0xf]
        %v842 = vld [vmem:[%s1 + $0x140] sm:$0xf]
        %v843 = vld [vmem:[%s1 + $0x144] sm:$0xf]
        %v844 = vld [vmem:[%s1 + $0x148] sm:$0xf]
        %v845 = vld [vmem:[%s1 + $0x14c] sm:$0xf]
        %v846 = vld [vmem:[%s1 + $0x150] sm:$0xf]
        %v847 = vld [vmem:[%s1 + $0x154] sm:$0xf]
        %v848 = vld [vmem:[%s1 + $0x158] sm:$0xf]
        %v849 = vld [vmem:[%s1 + $0x15c] sm:$0xf]
        %v850 = vld [vmem:[%s1 + $0x160] sm:$0xf]
        %v851 = vld [vmem:[%s1 + $0x164] sm:$0xf]
        %v852 = vld [vmem:[%s1 + $0x168] sm:$0xf]
        %v853 = vld [vmem:[%s1 + $0x16c] sm:$0xf]
        %v854 = vld [vmem:[%s1 + $0x170] sm:$0xf]
        %v855 = vld [vmem:[%s1 + $0x174] sm:$0xf]
        %v856 = vld [vmem:[%s1 + $0x178] sm:$0xf]
        %v857 = vld [vmem:[%s1 + $0x17c] sm:$0xf]
        %v858 = vld [vmem:[%s2] sm:$0x1]
        %v860 = vlaneseq
        %v861 = vshrl.u32 %v860, 7
        %v862 = vsub.s32 0, %v861
        %v863 = vrot.slane %v858, %v862
        %v868 = vunpack.c.l.b16 %v759
        %v869 = vunpack.c.h.b16 %v759
        %v870 = vunpack.c.l.b16 %v760
        %v871 = vunpack.c.h.b16 %v760
        %v872 = vunpack.c.l.b16 %v761
        %v873 = vunpack.c.h.b16 %v761
        %v874 = vpack.c.b16 %v868, %v868
        %v875 = vpack.c.b16 %v869, %v869
        %v876 = vpack.c.b16 %v870, %v870
        %v877 = vpack.c.b16 %v871, %v871
        %v878 = vpack.c.b16 %v872, %v872
        %v879 = vpack.c.b16 %v873, %v873
        %v982 = vunpack.c.l.b16 %v762
        %v983 = vunpack.c.l.b16 %v763
        %v984 = vunpack.c.l.b16 %v764
        %v985 = vunpack.c.l.b16 %v765
        %v986 = vunpack.c.l.b16 %v766
        %v987 = vunpack.c.l.b16 %v767
        %v988 = vunpack.c.l.b16 %v768
        %v989 = vunpack.c.l.b16 %v769
        %v990 = vunpack.c.l.b16 %v770
        %v991 = vunpack.c.l.b16 %v771
        %v992 = vunpack.c.l.b16 %v772
        %v993 = vunpack.c.l.b16 %v773
        %v994 = vunpack.c.l.b16 %v774
        %v995 = vunpack.c.l.b16 %v775
        %v996 = vunpack.c.l.b16 %v776
        %v997 = vunpack.c.l.b16 %v777
        %v998 = vunpack.c.l.b16 %v778
        %v999 = vunpack.c.l.b16 %v779
        %v1000 = vunpack.c.l.b16 %v780
        %v1001 = vunpack.c.l.b16 %v781
        %v1002 = vunpack.c.l.b16 %v782
        %v1003 = vunpack.c.l.b16 %v783
        %v1004 = vunpack.c.l.b16 %v784
        %v1005 = vunpack.c.l.b16 %v785
        %v1006 = vunpack.c.l.b16 %v786
        %v1007 = vunpack.c.l.b16 %v787
        %v1008 = vunpack.c.l.b16 %v788
        %v1009 = vunpack.c.l.b16 %v789
        %v1010 = vunpack.c.l.b16 %v790
        %v1011 = vunpack.c.l.b16 %v791
        %v1012 = vunpack.c.l.b16 %v792
        %v1013 = vunpack.c.l.b16 %v793
        %v1014 = vunpack.c.l.b16 %v794
        %v1015 = vunpack.c.l.b16 %v795
        %v1016 = vunpack.c.l.b16 %v796
        %v1017 = vunpack.c.l.b16 %v797
        %v1018 = vunpack.c.l.b16 %v798
        %v1019 = vunpack.c.l.b16 %v799
        %v1020 = vunpack.c.l.b16 %v800
        %v1021 = vunpack.c.l.b16 %v801
        %v1022 = vunpack.c.l.b16 %v802
        %v1023 = vunpack.c.l.b16 %v803
        %v1024 = vunpack.c.l.b16 %v804
        %v1025 = vunpack.c.l.b16 %v805
        %v1026 = vunpack.c.l.b16 %v806
        %v1027 = vunpack.c.l.b16 %v807
        %v1028 = vunpack.c.l.b16 %v808
        %v1029 = vunpack.c.l.b16 %v809
        %v1030 = vunpack.c.l.b16 %v810
        %v1031 = vunpack.c.l.b16 %v811
        %v1032 = vunpack.c.l.b16 %v812
        %v1033 = vunpack.c.l.b16 %v813
        %v1034 = vunpack.c.l.b16 %v814
        %v1035 = vunpack.c.l.b16 %v815
        %v1036 = vunpack.c.l.b16 %v816
        %v1037 = vunpack.c.l.b16 %v817
        %v1038 = vunpack.c.l.b16 %v818
        %v1039 = vunpack.c.l.b16 %v819
        %v1040 = vunpack.c.l.b16 %v820
        %v1041 = vunpack.c.l.b16 %v821
        %v1042 = vunpack.c.l.b16 %v822
        %v1043 = vunpack.c.l.b16 %v823
        %v1044 = vunpack.c.l.b16 %v824
        %v1045 = vunpack.c.l.b16 %v825
        %v1046 = vunpack.c.l.b16 %v826
        %v1047 = vunpack.c.l.b16 %v827
        %v1048 = vunpack.c.l.b16 %v828
        %v1049 = vunpack.c.l.b16 %v829
        %v1050 = vunpack.c.l.b16 %v830
        %v1051 = vunpack.c.l.b16 %v831
        %v1052 = vunpack.c.l.b16 %v832
        %v1053 = vunpack.c.l.b16 %v833
        %v1054 = vunpack.c.l.b16 %v834
        %v1055 = vunpack.c.l.b16 %v835
        %v1056 = vunpack.c.l.b16 %v836
        %v1057 = vunpack.c.l.b16 %v837
        %v1058 = vunpack.c.l.b16 %v838
        %v1059 = vunpack.c.l.b16 %v839
        %v1060 = vunpack.c.l.b16 %v840
        %v1061 = vunpack.c.l.b16 %v841
        %v1062 = vunpack.c.l.b16 %v842
        %v1063 = vunpack.c.l.b16 %v843
        %v1064 = vunpack.c.l.b16 %v844
        %v1065 = vunpack.c.l.b16 %v845
        %v1066 = vunpack.c.l.b16 %v846
        %v1067 = vunpack.c.l.b16 %v847
        %v1068 = vunpack.c.l.b16 %v848
        %v1069 = vunpack.c.l.b16 %v849
        %v1070 = vunpack.c.l.b16 %v850
        %v1071 = vunpack.c.l.b16 %v851
        %v1072 = vunpack.c.l.b16 %v852
        %v1073 = vunpack.c.l.b16 %v853
        %v1074 = vunpack.c.l.b16 %v854
        %v1075 = vunpack.c.l.b16 %v855
        %v1076 = vunpack.c.l.b16 %v856
        %v1077 = vunpack.c.l.b16 %v857
        %v1078 = vpack.c.b16 %v983, %v982
        %v1079 = vpack.c.b16 %v985, %v984
        %v1080 = vpack.c.b16 %v987, %v986
        %v1081 = vpack.c.b16 %v989, %v988
        %v1082 = vpack.c.b16 %v991, %v990
        %v1083 = vpack.c.b16 %v993, %v992
        %v1084 = vpack.c.b16 %v995, %v994
        %v1085 = vpack.c.b16 %v997, %v996
        %v1086 = vpack.c.b16 %v999, %v998
        %v1087 = vpack.c.b16 %v1001, %v1000
        %v1088 = vpack.c.b16 %v1003, %v1002
        %v1089 = vpack.c.b16 %v1005, %v1004
        %v1090 = vpack.c.b16 %v1007, %v1006
        %v1091 = vpack.c.b16 %v1009, %v1008
        %v1092 = vpack.c.b16 %v1011, %v1010
        %v1093 = vpack.c.b16 %v1013, %v1012
        %v1094 = vpack.c.b16 %v1015, %v1014
        %v1095 = vpack.c.b16 %v1017, %v1016
        %v1096 = vpack.c.b16 %v1019, %v1018
        %v1097 = vpack.c.b16 %v1021, %v1020
        %v1098 = vpack.c.b16 %v1023, %v1022
        %v1099 = vpack.c.b16 %v1025, %v1024
        %v1100 = vpack.c.b16 %v1027, %v1026
        %v1101 = vpack.c.b16 %v1029, %v1028
        %v1102 = vpack.c.b16 %v1031, %v1030
        %v1103 = vpack.c.b16 %v1033, %v1032
        %v1104 = vpack.c.b16 %v1035, %v1034
        %v1105 = vpack.c.b16 %v1037, %v1036
        %v1106 = vpack.c.b16 %v1039, %v1038
        %v1107 = vpack.c.b16 %v1041, %v1040
        %v1108 = vpack.c.b16 %v1043, %v1042
        %v1109 = vpack.c.b16 %v1045, %v1044
        %v1110 = vpack.c.b16 %v1047, %v1046
        %v1111 = vpack.c.b16 %v1049, %v1048
        %v1112 = vpack.c.b16 %v1051, %v1050
        %v1113 = vpack.c.b16 %v1053, %v1052
        %v1114 = vpack.c.b16 %v1055, %v1054
        %v1115 = vpack.c.b16 %v1057, %v1056
        %v1116 = vpack.c.b16 %v1059, %v1058
        %v1117 = vpack.c.b16 %v1061, %v1060
        %v1118 = vpack.c.b16 %v1063, %v1062
        %v1119 = vpack.c.b16 %v1065, %v1064
        %v1120 = vpack.c.b16 %v1067, %v1066
        %v1121 = vpack.c.b16 %v1069, %v1068
        %v1122 = vpack.c.b16 %v1071, %v1070
        %v1123 = vpack.c.b16 %v1073, %v1072
        %v1124 = vpack.c.b16 %v1075, %v1074
        %v1125 = vpack.c.b16 %v1077, %v1076
        %1174 = vmatprep.subr.bf16.mxu0 0
        %1175 = vmatpush1.bf16.msra.mxu0 %v1078
        %1176 = vmatprep.subr.bf16.mxu0 0
        %1177 = vmatpush1.bf16.msra.mxu0 %v1079
        %1178 = vmatprep.subr.bf16.mxu0 0
        %1179 = vmatpush1.bf16.msra.mxu0 %v1080
        %1180 = vmatprep.subr.bf16.mxu0 0
        %1181 = vmatpush1.bf16.msra.mxu0 %v1081
        %1182 = vmatprep.subr.bf16.mxu0 0
        %1183 = vmatpush1.bf16.msra.mxu0 %v1082
        %1184 = vmatprep.subr.bf16.mxu0 0
        %1185 = vmatpush1.bf16.msra.mxu0 %v1083
        %1186 = vmatprep.subr.bf16.mxu0 0
        %1187 = vmatpush1.bf16.msra.mxu0 %v1084
        %1188 = vmatprep.subr.bf16.mxu0 0
        %1189 = vmatpush1.bf16.msra.mxu0 %v1085
        %1190 = vmatprep.subr.bf16.mxu0 0
        %1191 = vmatpush1.bf16.msra.mxu0 %v1086
        %1192 = vmatprep.subr.bf16.mxu0 0
        %1193 = vmatpush1.bf16.msra.mxu0 %v1087
        %1194 = vmatprep.subr.bf16.mxu0 0
        %1195 = vmatpush1.bf16.msra.mxu0 %v1088
        %1196 = vmatprep.subr.bf16.mxu0 0
        %1197 = vmatpush1.bf16.msra.mxu0 %v1089
        %1198 = vmatprep.subr.bf16.mxu0 0
        %1199 = vmatpush1.bf16.msra.mxu0 %v1090
        %1200 = vmatprep.subr.bf16.mxu0 0
        %1201 = vmatpush1.bf16.msra.mxu0 %v1091
        %1202 = vmatprep.subr.bf16.mxu0 0
        %1203 = vmatpush1.bf16.msra.mxu0 %v1092
        %1204 = vmatprep.subr.bf16.mxu0 0
        %1205 = vmatpush1.bf16.msra.mxu0 %v1093
        %1206 = vmatprep.mubr.bf16.mxu0 %v875
        %1207 = vmatmul.mubr.bf16.gmra.mrb[0].mxu0 %v874
        %v1208 = vpop.f32.mrb[0].mxu0
        %v1209 = vadd.f32 %v863, %v1208
        %v1210 = vpop.f32.mrb[0].mxu0
        %v1211 = vpop.f32.mrb[0].mxu0
        %v1212 = vpop.f32.mrb[0].mxu0
        %1213 = vdwg.mxu0
        %1214 = vmatprep.subr.bf16.mxu0 0
        %1215 = vmatpush1.bf16.msra.mxu0 %v1094
        %1216 = vmatprep.subr.bf16.mxu0 0
        %1217 = vmatpush1.bf16.msra.mxu0 %v1095
        %1218 = vmatprep.subr.bf16.mxu0 0
        %1219 = vmatpush1.bf16.msra.mxu0 %v1096
        %1220 = vmatprep.subr.bf16.mxu0 0
        %1221 = vmatpush1.bf16.msra.mxu0 %v1097
        %1222 = vmatprep.subr.bf16.mxu0 0
        %1223 = vmatpush1.bf16.msra.mxu0 %v1098
        %1224 = vmatprep.subr.bf16.mxu0 0
        %1225 = vmatpush1.bf16.msra.mxu0 %v1099
        %1226 = vmatprep.subr.bf16.mxu0 0
        %1227 = vmatpush1.bf16.msra.mxu0 %v1100
        %1228 = vmatprep.subr.bf16.mxu0 0
        %1229 = vmatpush1.bf16.msra.mxu0 %v1101
        %1230 = vmatprep.subr.bf16.mxu0 0
        %1231 = vmatpush1.bf16.msra.mxu0 %v1102
        %1232 = vmatprep.subr.bf16.mxu0 0
        %1233 = vmatpush1.bf16.msra.mxu0 %v1103
        %1234 = vmatprep.subr.bf16.mxu0 0
        %1235 = vmatpush1.bf16.msra.mxu0 %v1104
        %1236 = vmatprep.subr.bf16.mxu0 0
        %1237 = vmatpush1.bf16.msra.mxu0 %v1105
        %1238 = vmatprep.subr.bf16.mxu0 0
        %1239 = vmatpush1.bf16.msra.mxu0 %v1106
        %1240 = vmatprep.subr.bf16.mxu0 0
        %1241 = vmatpush1.bf16.msra.mxu0 %v1107
        %1242 = vmatprep.subr.bf16.mxu0 0
        %1243 = vmatpush1.bf16.msra.mxu0 %v1108
        %1244 = vmatprep.subr.bf16.mxu0 0
        %1245 = vmatpush1.bf16.msra.mxu0 %v1109
        %1246 = vmatprep.mubr.bf16.mxu0 %v877
        %1247 = vmatmul.mubr.bf16.gmra.mrb[0].mxu0 %v876
        %v1248 = vpop.f32.mrb[0].mxu0
        %v1249 = vadd.f32 %v1209, %v1248
        %v1250 = vpop.f32.mrb[0].mxu0
        %v1251 = vpop.f32.mrb[0].mxu0
        %v1252 = vpop.f32.mrb[0].mxu0
        %1253 = vdwg.mxu0
        %1254 = vmatprep.subr.bf16.mxu0 0
        %1255 = vmatpush1.bf16.msra.mxu0 %v1110
        %1256 = vmatprep.subr.bf16.mxu0 0
        %1257 = vmatpush1.bf16.msra.mxu0 %v1111
        %1258 = vmatprep.subr.bf16.mxu0 0
        %1259 = vmatpush1.bf16.msra.mxu0 %v1112
        %1260 = vmatprep.subr.bf16.mxu0 0
        %1261 = vmatpush1.bf16.msra.mxu0 %v1113
        %1262 = vmatprep.subr.bf16.mxu0 0
        %1263 = vmatpush1.bf16.msra.mxu0 %v1114
        %1264 = vmatprep.subr.bf16.mxu0 0
        %1265 = vmatpush1.bf16.msra.mxu0 %v1115
        %1266 = vmatprep.subr.bf16.mxu0 0
        %1267 = vmatpush1.bf16.msra.mxu0 %v1116
        %1268 = vmatprep.subr.bf16.mxu0 0
        %1269 = vmatpush1.bf16.msra.mxu0 %v1117
        %1270 = vmatprep.subr.bf16.mxu0 0
        %1271 = vmatpush1.bf16.msra.mxu0 %v1118
        %1272 = vmatprep.subr.bf16.mxu0 0
        %1273 = vmatpush1.bf16.msra.mxu0 %v1119
        %1274 = vmatprep.subr.bf16.mxu0 0
        %1275 = vmatpush1.bf16.msra.mxu0 %v1120
        %1276 = vmatprep.subr.bf16.mxu0 0
        %1277 = vmatpush1.bf16.msra.mxu0 %v1121
        %1278 = vmatprep.subr.bf16.mxu0 0
        %1279 = vmatpush1.bf16.msra.mxu0 %v1122
        %1280 = vmatprep.subr.bf16.mxu0 0
        %1281 = vmatpush1.bf16.msra.mxu0 %v1123
        %1282 = vmatprep.subr.bf16.mxu0 0
        %1283 = vmatpush1.bf16.msra.mxu0 %v1124
        %1284 = vmatprep.subr.bf16.mxu0 0
        %1285 = vmatpush1.bf16.msra.mxu0 %v1125
        %1286 = vmatprep.mubr.bf16.mxu0 %v879
        %1287 = vmatmul.mubr.bf16.gmra.mrb[0].mxu0 %v878
        %v1288 = vpop.f32.mrb[0].mxu0
        %v1289 = vadd.f32 %v1249, %v1288
        %v1290 = vpop.f32.mrb[0].mxu0
        %v1291 = vpop.f32.mrb[0].mxu0
        %v1292 = vpop.f32.mrb[0].mxu0
        %1293 = vdwg.mxu0
        %v1294 = vld [vmem:[%s3] sm:$0x1]
        %v1295 = vld [vmem:[%s4] sm:$0x1]
        %v1296 = vadd.f32 %v1294, %v1295
        %v1297 = vld [vmem:[%s4 + $0x1] sm:$0xf]
        %v1298 = vadd.f32 %v1289, %v1297
        %v1300 = vrot.slane %v1297, 4
        %v1302 = vadd.f32 %v1289, %v1300
        %v1304 = vrot.slane %v1298, 7
        %v1307 = vlaneseq
        %v1308 = vshrl.u32 %v1307, 7
        %v1309 = vsub.s32 0, %v1308
        %v1310 = vrot.slane %v1296, %v1309
        %v1313 = vrot.slane %v1302, 6
        %vm1315 = vcmask 1040384
        %v1316 = vsel %vm1315, %v1296, %v1304
        %vm1317 = vcmask 1044480
        %v1318 = vsel %vm1317, %v1316, %v1310
        %vm1319 = vcmask 1045504
        %v1320 = vsel %vm1319, %v1318, %v1313
        %vm1321 = vcmask 261120
        %1322 = vst.msk [vmem:[#allocation2] sm:$0xff] %vm1321, %v1320
        %vm1323 = vcmask 254976
        %1324 = vst.msk [vmem:[#allocation2 + $0x8] sm:$0x3] %vm1323, %v1313
      $region92: #{tpu_custom_call.1} parent=87 // pred_fallthru
        _
      %v1325 = vld [vmem:[#allocation2] sm:$0xff]
      %v1326 = vld [vmem:[#allocation2 + $0x8] sm:$0x3]
      %v1327 = vld [vmem:[%s706] sm:$0x1]
      %v1328 = vld [vmem:[%s709] sm:$0x1]
      %vm1329 = vcmask 261120
      %v1330 = vsel %vm1329, %v1325, 0.0
      %1331 = vadd.xlane.f32.xlu0 %v1330
      %v1332 = vpop.xlane.xlu0 %1331
      %vm1333 = vcmask 254976
      %v1334 = vsel %vm1333, %v1326, 0.0
      %1335 = vadd.xlane.f32.xlu0 %v1334
      %v1336 = vpop.xlane.xlu0 %1335
      %v1337 = vrcp.pop 32.0
      %v1338 = vmul.f32 %v1332, %v1337
      %v1339 = vmul.f32 %v1336, %v1337
      %v1340 = vsub.f32 %v1325, %v1338
      %v1341 = vsub.f32 %v1326, %v1339
      %v1342 = vmul.f32 %v1340, %v1340
      %v1343 = vmul.f32 %v1341, %v1341
      %v1344 = vsel %vm1329, %v1342, 0.0
      %1345 = vadd.xlane.f32.xlu0 %v1344
      %v1346 = vpop.xlane.xlu0 %1345
      %v1347 = vsel %vm1333, %v1343, 0.0
      %1348 = vadd.xlane.f32.xlu0 %v1347
      %v1349 = vpop.xlane.xlu0 %1348
      %v1350 = vmul.f32 %v1346, %v1337
      %v1351 = vmul.f32 %v1349, %v1337
      %v1352 = vadd.f32 %v1350, 1e-06
      %v1353 = vadd.f32 %v1351, 1e-06
      %v1354 = vrsqrt.pop %v1352
      %v1355 = vrsqrt.pop %v1353
      %v1356 = vmul.f32 %v1340, %v1354
      %v1357 = vmul.f32 %v1341, %v1355
      %v1359 = vlaneseq
      %v1360 = vshrl.u32 %v1359, 7
      %v1361 = vsub.s32 0, %v1360
      %v1362 = vrot.slane %v1327, %v1361
      %v1364 = vmul.f32 %v1356, %v1362
      %v1365 = vmul.f32 %v1357, %v1362
      %v1367 = vlaneseq
      %v1368 = vshrl.u32 %v1367, 7
      %v1369 = vsub.s32 0, %v1368
      %v1370 = vrot.slane %v1328, %v1369
      %v1372 = vadd.f32 %v1364, %v1370
      %v1373 = vadd.f32 %v1365, %v1370
      %v1374 = vpack.c.bf16 %v1373, %v1372
      %v1375 = vld [vmem:[%s714] sm:$0xf]
      %v1376 = vld [vmem:[%s714 + $0x4] sm:$0xf]
      %v1377 = vld [vmem:[%s714 + $0x8] sm:$0xf]
      %v1378 = vld [vmem:[%s714 + $0xc] sm:$0xf]
      %v1379 = vld [vmem:[%s717] sm:$0x1]
      %v1381 = vlaneseq
      %v1382 = vshrl.u32 %v1381, 7
      %v1383 = vsub.s32 0, %v1382
      %v1384 = vrot.slane %v1379, %v1383
      %v1390 = vunpack.c.l.b16 %v1375
      %v1391 = vunpack.c.l.b16 %v1376
      %v1392 = vunpack.c.l.b16 %v1377
      %v1393 = vunpack.c.l.b16 %v1378
      %v1394 = vpack.c.b16 %v1391, %v1390
      %v1395 = vpack.c.b16 %v1393, %v1392
      %v1399 = vsel %vm1329, %v1374, 0
      %1401 = vmatprep.subr.bf16.mxu0 0
      %1402 = vmatpush1.bf16.msra.mxu0 %v1394
      %1403 = vmatprep.subr.bf16.mxu0 0
      %1404 = vmatpush1.bf16.msra.mxu0 %v1395
      %1405 = vmatprep.subr.bf16.mxu0 0
      %1406 = vmatpush1.bf16.msra.mxu0 0
      %1407 = vmatprep.subr.bf16.mxu0 0
      %1408 = vmatpush1.bf16.msra.mxu0 0
      %1409 = vmatprep.subr.bf16.mxu0 0
      %1410 = vmatpush1.bf16.msra.mxu0 0
      %1411 = vmatprep.subr.bf16.mxu0 0
      %1412 = vmatpush1.bf16.msra.mxu0 0
      %1413 = vmatprep.subr.bf16.mxu0 0
      %1414 = vmatpush1.bf16.msra.mxu0 0
      %1415 = vmatprep.subr.bf16.mxu0 0
      %1416 = vmatpush1.bf16.msra.mxu0 0
      %1417 = vmatprep.subr.bf16.mxu0 0
      %1418 = vmatpush1.bf16.msra.mxu0 0
      %1419 = vmatprep.subr.bf16.mxu0 0
      %1420 = vmatpush1.bf16.msra.mxu0 0
      %1421 = vmatprep.subr.bf16.mxu0 0
      %1422 = vmatpush1.bf16.msra.mxu0 0
      %1423 = vmatprep.subr.bf16.mxu0 0
      %1424 = vmatpush1.bf16.msra.mxu0 0
      %1425 = vmatprep.subr.bf16.mxu0 0
      %1426 = vmatpush1.bf16.msra.mxu0 0
      %1427 = vmatprep.subr.bf16.mxu0 0
      %1428 = vmatpush1.bf16.msra.mxu0 0
      %1429 = vmatprep.subr.bf16.mxu0 0
      %1430 = vmatpush1.bf16.msra.mxu0 0
      %1431 = vmatprep.subr.bf16.mxu0 0
      %1432 = vmatpush1.bf16.msra.mxu0 0
      %1433 = vmatprep.mubr.bf16.mxu0 0
      %1434 = vmatmul.mubr.bf16.gmra.mrb[0].mxu0 %v1399
      %v1435 = vpop.f32.mrb[0].mxu0
      %v1436 = vadd.f32 %v1384, %v1435
      %v1437 = vpop.f32.mrb[0].mxu0
      %v1438 = vpop.f32.mrb[0].mxu0
      %v1439 = vadd.f32 %v1384, %v1438
      %v1440 = vpop.f32.mrb[0].mxu0
      %1441 = vdwg.mxu0
      %v1442 = vmul.f32 %v1436, 0.25
      %v1443 = vpack.c.bf16 %v1442, %v1442
      %v1444 = vpack.c.bf16 %v1436, %v1436
      %1446 = vrot.lane.b32.xlu0 %v1444, 96
      %v1447 = vpop.permute.xlu0 %1446
      %vm1448 = vcmask 130048
      %v1450 = vsel %vm1448, %v1443, 0
      %v1453 = vsel %vm1448, %v1447, 0
      %1455 = vmatprep.subr.bf16.mxu0 0
      %1456 = vmatpush1.bf16.xpose.msra.mxu0 %v1453
      %1457 = vmatprep.subr.bf16.mxu0 0
      %1458 = vmatpush1.bf16.xpose.msra.mxu0 0
      %1459 = vmatprep.subr.bf16.mxu0 0
      %1460 = vmatpush1.bf16.xpose.msra.mxu0 0
      %1461 = vmatprep.subr.bf16.mxu0 0
      %1462 = vmatpush1.bf16.xpose.msra.mxu0 0
      %1463 = vmatprep.subr.bf16.mxu0 0
      %1464 = vmatpush1.bf16.xpose.msra.mxu0 0
      %1465 = vmatprep.subr.bf16.mxu0 0
      %1466 = vmatpush1.bf16.xpose.msra.mxu0 0
      %1467 = vmatprep.subr.bf16.mxu0 0
      %1468 = vmatpush1.bf16.xpose.msra.mxu0 0
      %1469 = vmatprep.subr.bf16.mxu0 0
      %1470 = vmatpush1.bf16.xpose.msra.mxu0 0
      %1471 = vmatprep.subr.bf16.mxu0 0
      %1472 = vmatpush1.bf16.xpose.msra.mxu0 0
      %1473 = vmatprep.subr.bf16.mxu0 0
      %1474 = vmatpush1.bf16.xpose.msra.mxu0 0
      %1475 = vmatprep.subr.bf16.mxu0 0
      %1476 = vmatpush1.bf16.xpose.msra.mxu0 0
      %1477 = vmatprep.subr.bf16.mxu0 0
      %1478 = vmatpush1.bf16.xpose.msra.mxu0 0
      %1479 = vmatprep.subr.bf16.mxu0 0
      %1480 = vmatpush1.bf16.xpose.msra.mxu0 0
      %1481 = vmatprep.subr.bf16.mxu0 0
      %1482 = vmatpush1.bf16.xpose.msra.mxu0 0
      %1483 = vmatprep.subr.bf16.mxu0 0
      %1484 = vmatpush1.bf16.xpose.msra.mxu0 0
      %1485 = vmatprep.subr.bf16.mxu0 0
      %1486 = vmatpush1.bf16.xpose.msra.mxu0 0
      %1487 = vmatprep.mubr.bf16.mxu0 0
      %1488 = vmatmul.mubr.bf16.gmra.mrb[0].mxu0 %v1450
      %v1489 = vpop.f32.mrb[0].mxu0
      %v1490 = vadd.f32 0.0, %v1489
      %v1491 = vpop.f32.mrb[0].mxu0
      %v1492 = vpop.f32.mrb[0].mxu0
      %v1493 = vpop.f32.mrb[0].mxu0
      %1494 = vdwg.mxu0
      %vm1495 = vcmask 36864
      %v1496 = vsel %vm1495, %v1490, -inf
      %1497 = vmax.xlane.f32.xlu0 %v1496
      %v1498 = vpop.xlane.xlu0 %1497
      %v1499 = vsub.f32 %v1490, %v1498
      %v1500 = vmul.f32 %v1499, 1.442695
      %v1501 = vpow.pop %v1500
      %v1502 = vsel %vm1495, %v1501, 0.0
      %1503 = vadd.xlane.f32.xlu0 %v1502
      %v1504 = vpop.xlane.xlu0 %1503
      %v1505 = vrcp.pop %v1504
      %v1506 = vmul.f32 %v1501, %v1505
      %v1507 = vpack.c.bf16 %v1506, %v1506
      %1508 = vrot.lane.b32.xlu0 %v1444, 64
      %v1509 = vpop.permute.xlu0 %1508
      %vm1510 = vcmask 39936
      %v1512 = vsel %vm1510, %v1507, 0
      %vm1514 = vcmask 1041408
      %vm1515 = vcmask 1042432
      %v1516 = vsel %vm1514, 4294967295, 65535
      %v1517 = vsel %vm1515, %v1516, 0
      %v1519 = vand.u32 %v1509, %v1517
      %1521 = vmatprep.subr.bf16.mxu0 0
      %1522 = vmatpush1.bf16.msra.mxu0 %v1519
      %1523 = vmatprep.subr.bf16.mxu0 0
      %1524 = vmatpush1.bf16.msra.mxu0 0
      %1525 = vmatprep.subr.bf16.mxu0 0
      %1526 = vmatpush1.bf16.msra.mxu0 0
      %1527 = vmatprep.subr.bf16.mxu0 0
      %1528 = vmatpush1.bf16.msra.mxu0 0
      %1529 = vmatprep.subr.bf16.mxu0 0
      %1530 = vmatpush1.bf16.msra.mxu0 0
      %1531 = vmatprep.subr.bf16.mxu0 0
      %1532 = vmatpush1.bf16.msra.mxu0 0
      %1533 = vmatprep.subr.bf16.mxu0 0
      %1534 = vmatpush1.bf16.msra.mxu0 0
      %1535 = vmatprep.subr.bf16.mxu0 0
      %1536 = vmatpush1.bf16.msra.mxu0 0
      %1537 = vmatprep.subr.bf16.mxu0 0
      %1538 = vmatpush1.bf16.msra.mxu0 0
      %1539 = vmatprep.subr.bf16.mxu0 0
      %1540 = vmatpush1.bf16.msra.mxu0 0
      %1541 = vmatprep.subr.bf16.mxu0 0
      %1542 = vmatpush1.bf16.msra.mxu0 0
      %1543 = vmatprep.subr.bf16.mxu0 0
      %1544 = vmatpush1.bf16.msra.mxu0 0
      %1545 = vmatprep.subr.bf16.mxu0 0
      %1546 = vmatpush1.bf16.msra.mxu0 0
      %1547 = vmatprep.subr.bf16.mxu0 0
      %1548 = vmatpush1.bf16.msra.mxu0 0
      %1549 = vmatprep.subr.bf16.mxu0 0
      %1550 = vmatpush1.bf16.msra.mxu0 0
      %1551 = vmatprep.subr.bf16.mxu0 0
      %1552 = vmatpush1.bf16.msra.mxu0 0
      %1553 = vmatprep.mubr.bf16.mxu0 0
      %1554 = vmatmul.mubr.bf16.gmra.mrb[0].mxu0 %v1512
      %v1555 = vpop.f32.mrb[0].mxu0
      %v1556 = vadd.f32 0.0, %v1555
      %v1557 = vpop.f32.mrb[0].mxu0
      %v1558 = vpop.f32.mrb[0].mxu0
      %v1559 = vpop.f32.mrb[0].mxu0
      %1560 = vdwg.mxu0
      %1562 = vrot.lane.b32.xlu0 %v1443, 112
      %v1563 = vpop.permute.xlu0 %1562
      %1564 = vrot.lane.b32.xlu0 %v1444, 80
      %v1565 = vpop.permute.xlu0 %1564
      %v1567 = vsel %vm1448, %v1563, 0
      %v1570 = vsel %vm1448, %v1565, 0
      %1572 = vmatprep.subr.bf16.mxu0 0
      %1573 = vmatpush1.bf16.xpose.msra.mxu0 %v1570
      %1574 = vmatprep.subr.bf16.mxu0 0
      %1575 = vmatpush1.bf16.xpose.msra.mxu0 0
      %1576 = vmatprep.subr.bf16.mxu0 0
      %1577 = vmatpush1.bf16.xpose.msra.mxu0 0
      %1578 = vmatprep.subr.bf16.mxu0 0
      %1579 = vmatpush1.bf16.xpose.msra.mxu0 0
      %1580 = vmatprep.subr.bf16.mxu0 0
      %1581 = vmatpush1.bf16.xpose.msra.mxu0 0
      %1582 = vmatprep.subr.bf16.mxu0 0
      %1583 = vmatpush1.bf16.xpose.msra.mxu0 0
      %1584 = vmatprep.subr.bf16.mxu0 0
      %1585 = vmatpush1.bf16.xpose.msra.mxu0 0
      %1586 = vmatprep.subr.bf16.mxu0 0
      %1587 = vmatpush1.bf16.xpose.msra.mxu0 0
      %1588 = vmatprep.subr.bf16.mxu0 0
      %1589 = vmatpush1.bf16.xpose.msra.mxu0 0
      %1590 = vmatprep.subr.bf16.mxu0 0
      %1591 = vmatpush1.bf16.xpose.msra.mxu0 0
      %1592 = vmatprep.subr.bf16.mxu0 0
      %1593 = vmatpush1.bf16.xpose.msra.mxu0 0
      %1594 = vmatprep.subr.bf16.mxu0 0
      %1595 = vmatpush1.bf16.xpose.msra.mxu0 0
      %1596 = vmatprep.subr.bf16.mxu0 0
      %1597 = vmatpush1.bf16.xpose.msra.mxu0 0
      %1598 = vmatprep.subr.bf16.mxu0 0
      %1599 = vmatpush1.bf16.xpose.msra.mxu0 0
      %1600 = vmatprep.subr.bf16.mxu0 0
      %1601 = vmatpush1.bf16.xpose.msra.mxu0 0
      %1602 = vmatprep.subr.bf16.mxu0 0
      %1603 = vmatpush1.bf16.xpose.msra.mxu0 0
      %1604 = vmatprep.mubr.bf16.mxu0 0
      %1605 = vmatmul.mubr.bf16.gmra.mrb[0].mxu0 %v1567
      %v1606 = vpop.f32.mrb[0].mxu0
      %v1607 = vadd.f32 0.0, %v1606
      %v1608 = vpop.f32.mrb[0].mxu0
      %v1609 = vpop.f32.mrb[0].mxu0
      %v1610 = vpop.f32.mrb[0].mxu0
      %1611 = vdwg.mxu0
      %v1612 = vsel %vm1495, %v1607, -inf
      %1613 = vmax.xlane.f32.xlu0 %v1612
      %v1614 = vpop.xlane.xlu0 %1613
      %v1615 = vsub.f32 %v1607, %v1614
      %v1616 = vmul.f32 %v1615, 1.442695
      %v1617 = vpow.pop %v1616
      %v1618 = vsel %vm1495, %v1617, 0.0
      %1619 = vadd.xlane.f32.xlu0 %v1618
      %v1620 = vpop.xlane.xlu0 %1619
      %v1621 = vrcp.pop %v1620
      %v1622 = vmul.f32 %v1617, %v1621
      %v1623 = vpack.c.bf16 %v1622, %v1622
      %1624 = vrot.lane.b32.xlu0 %v1444, 48
      %v1625 = vpop.permute.xlu0 %1624
      %v1627 = vsel %vm1510, %v1623, 0
      %v1630 = vand.u32 %v1625, %v1517
      %1632 = vmatprep.subr.bf16.mxu0 0
      %1633 = vmatpush1.bf16.msra.mxu0 %v1630
      %1634 = vmatprep.subr.bf16.mxu0 0
      %1635 = vmatpush1.bf16.msra.mxu0 0
      %1636 = vmatprep.subr.bf16.mxu0 0
      %1637 = vmatpush1.bf16.msra.mxu0 0
      %1638 = vmatprep.subr.bf16.mxu0 0
      %1639 = vmatpush1.bf16.msra.mxu0 0
      %1640 = vmatprep.subr.bf16.mxu0 0
      %1641 = vmatpush1.bf16.msra.mxu0 0
      %1642 = vmatprep.subr.bf16.mxu0 0
      %1643 = vmatpush1.bf16.msra.mxu0 0
      %1644 = vmatprep.subr.bf16.mxu0 0
      %1645 = vmatpush1.bf16.msra.mxu0 0
      %1646 = vmatprep.subr.bf16.mxu0 0
      %1647 = vmatpush1.bf16.msra.mxu0 0
      %1648 = vmatprep.subr.bf16.mxu0 0
      %1649 = vmatpush1.bf16.msra.mxu0 0
      %1650 = vmatprep.subr.bf16.mxu0 0
      %1651 = vmatpush1.bf16.msra.mxu0 0
      %1652 = vmatprep.subr.bf16.mxu0 0
      %1653 = vmatpush1.bf16.msra.mxu0 0
      %1654 = vmatprep.subr.bf16.mxu0 0
      %1655 = vmatpush1.bf16.msra.mxu0 0
      %1656 = vmatprep.subr.bf16.mxu0 0
      %1657 = vmatpush1.bf16.msra.mxu0 0
      %1658 = vmatprep.subr.bf16.mxu0 0
      %1659 = vmatpush1.bf16.msra.mxu0 0
      %1660 = vmatprep.subr.bf16.mxu0 0
      %1661 = vmatpush1.bf16.msra.mxu0 0
      %1662 = vmatprep.subr.bf16.mxu0 0
      %1663 = vmatpush1.bf16.msra.mxu0 0
      %1664 = vmatprep.mubr.bf16.mxu0 0
      %1665 = vmatmul.mubr.bf16.gmra.mrb[0].mxu0 %v1627
      %v1666 = vpop.f32.mrb[0].mxu0
      %v1667 = vadd.f32 0.0, %v1666
      %v1668 = vpop.f32.mrb[0].mxu0
      %v1669 = vpop.f32.mrb[0].mxu0
      %v1670 = vpop.f32.mrb[0].mxu0
      %1671 = vdwg.mxu0
      %1673 = vrot.lane.b32.xlu0 %v1667, 16
      %v1674 = vpop.permute.xlu0 %1673
      %v1676 = vsel %vm1448, %v1556, %v1674
      %v1677 = vmul.f32 %v1439, 0.25
      %v1678 = vpack.c.bf16 %v1677, %v1442
      %v1679 = vpack.c.bf16 %v1439, %v1436
      %v1681 = vshrl.u32 %v1678, 16
      %v1683 = vrot.slane %v1681, 2
      %v1684 = vshll.u32 %v1678, 16
      %v1686 = vrot.slane %v1684, 3
      %v1687 = vor.u32 %v1683, %v1686
      %v1689 = vshrl.u32 %v1679, 16
      %v1691 = vrot.slane %v1689, 2
      %v1692 = vshll.u32 %v1679, 16
      %v1694 = vrot.slane %v1692, 3
      %v1695 = vor.u32 %v1691, %v1694
      %1696 = vrot.lane.b32.xlu0 %v1695, 96
      %v1697 = vpop.permute.xlu0 %1696
      %v1699 = vsel %vm1448, %v1687, 0
      %v1702 = vsel %vm1448, %v1697, 0
      %1704 = vmatprep.subr.bf16.mxu0 0
      %1705 = vmatpush1.bf16.xpose.msra.mxu0 %v1702
      %1706 = vmatprep.subr.bf16.mxu0 0
      %1707 = vmatpush1.bf16.xpose.msra.mxu0 0
      %1708 = vmatprep.subr.bf16.mxu0 0
      %1709 = vmatpush1.bf16.xpose.msra.mxu0 0
      %1710 = vmatprep.subr.bf16.mxu0 0
      %1711 = vmatpush1.bf16.xpose.msra.mxu0 0
      %1712 = vmatprep.subr.bf16.mxu0 0
      %1713 = vmatpush1.bf16.xpose.msra.mxu0 0
      %1714 = vmatprep.subr.bf16.mxu0 0
      %1715 = vmatpush1.bf16.xpose.msra.mxu0 0
      %1716 = vmatprep.subr.bf16.mxu0 0
      %1717 = vmatpush1.bf16.xpose.msra.mxu0 0
      %1718 = vmatprep.subr.bf16.mxu0 0
      %1719 = vmatpush1.bf16.xpose.msra.mxu0 0
      %1720 = vmatprep.subr.bf16.mxu0 0
      %1721 = vmatpush1.bf16.xpose.msra.mxu0 0
      %1722 = vmatprep.subr.bf16.mxu0 0
      %1723 = vmatpush1.bf16.xpose.msra.mxu0 0
      %1724 = vmatprep.subr.bf16.mxu0 0
      %1725 = vmatpush1.bf16.xpose.msra.mxu0 0
      %1726 = vmatprep.subr.bf16.mxu0 0
      %1727 = vmatpush1.bf16.xpose.msra.mxu0 0
      %1728 = vmatprep.subr.bf16.mxu0 0
      %1729 = vmatpush1.bf16.xpose.msra.mxu0 0
      %1730 = vmatprep.subr.bf16.mxu0 0
      %1731 = vmatpush1.bf16.xpose.msra.mxu0 0
      %1732 = vmatprep.subr.bf16.mxu0 0
      %1733 = vmatpush1.bf16.xpose.msra.mxu0 0
      %1734 = vmatprep.subr.bf16.mxu0 0
      %1735 = vmatpush1.bf16.xpose.msra.mxu0 0
      %1736 = vmatprep.mubr.bf16.mxu0 0
      %1737 = vmatmul.mubr.bf16.gmra.mrb[0].mxu0 %v1699
      %v1738 = vpop.f32.mrb[0].mxu0
      %v1739 = vadd.f32 0.0, %v1738
      %v1740 = vpop.f32.mrb[0].mxu0
      %v1741 = vpop.f32.mrb[0].mxu0
      %v1742 = vpop.f32.mrb[0].mxu0
      %1743 = vdwg.mxu0
      %v1744 = vsel %vm1495, %v1739, -inf
      %1745 = vmax.xlane.f32.xlu0 %v1744
      %v1746 = vpop.xlane.xlu0 %1745
      %v1747 = vsub.f32 %v1739, %v1746
      %v1748 = vmul.f32 %v1747, 1.442695
      %v1749 = vpow.pop %v1748
      %v1750 = vsel %vm1495, %v1749, 0.0
      %1751 = vadd.xlane.f32.xlu0 %v1750
      %v1752 = vpop.xlane.xlu0 %1751
      %v1753 = vrcp.pop %v1752
      %v1754 = vmul.f32 %v1749, %v1753
      %v1755 = vpack.c.bf16 %v1754, %v1754
      %1756 = vrot.lane.b32.xlu0 %v1695, 64
      %v1757 = vpop.permute.xlu0 %1756
      %v1759 = vsel %vm1510, %v1755, 0
      %v1762 = vand.u32 %v1757, %v1517
      %1764 = vmatprep.subr.bf16.mxu0 0
      %1765 = vmatpush1.bf16.msra.mxu0 %v1762
      %1766 = vmatprep.subr.bf16.mxu0 0
      %1767 = vmatpush1.bf16.msra.mxu0 0
      %1768 = vmatprep.subr.bf16.mxu0 0
      %1769 = vmatpush1.bf16.msra.mxu0 0
      %1770 = vmatprep.subr.bf16.mxu0 0
      %1771 = vmatpush1.bf16.msra.mxu0 0
      %1772 = vmatprep.subr.bf16.mxu0 0
      %1773 = vmatpush1.bf16.msra.mxu0 0
      %1774 = vmatprep.subr.bf16.mxu0 0
      %1775 = vmatpush1.bf16.msra.mxu0 0
      %1776 = vmatprep.subr.bf16.mxu0 0
      %1777 = vmatpush1.bf16.msra.mxu0 0
      %1778 = vmatprep.subr.bf16.mxu0 0
      %1779 = vmatpush1.bf16.msra.mxu0 0
      %1780 = vmatprep.subr.bf16.mxu0 0
      %1781 = vmatpush1.bf16.msra.mxu0 0
      %1782 = vmatprep.subr.bf16.mxu0 0
      %1783 = vmatpush1.bf16.msra.mxu0 0
      %1784 = vmatprep.subr.bf16.mxu0 0
      %1785 = vmatpush1.bf16.msra.mxu0 0
      %1786 = vmatprep.subr.bf16.mxu0 0
      %1787 = vmatpush1.bf16.msra.mxu0 0
      %1788 = vmatprep.subr.bf16.mxu0 0
      %1789 = vmatpush1.bf16.msra.mxu0 0
      %1790 = vmatprep.subr.bf16.mxu0 0
      %1791 = vmatpush1.bf16.msra.mxu0 0
      %1792 = vmatprep.subr.bf16.mxu0 0
      %1793 = vmatpush1.bf16.msra.mxu0 0
      %1794 = vmatprep.subr.bf16.mxu0 0
      %1795 = vmatpush1.bf16.msra.mxu0 0
      %1796 = vmatprep.mubr.bf16.mxu0 0
      %1797 = vmatmul.mubr.bf16.gmra.mrb[0].mxu0 %v1759
      %v1798 = vpop.f32.mrb[0].mxu0
      %v1799 = vadd.f32 0.0, %v1798
      %v1800 = vpop.f32.mrb[0].mxu0
      %v1801 = vpop.f32.mrb[0].mxu0
      %v1802 = vpop.f32.mrb[0].mxu0
      %1803 = vdwg.mxu0
      %1804 = vrot.lane.b32.xlu0 %v1687, 112
      %v1805 = vpop.permute.xlu0 %1804
      %1806 = vrot.lane.b32.xlu0 %v1695, 80
      %v1807 = vpop.permute.xlu0 %1806
      %v1809 = vsel %vm1448, %v1805, 0
      %v1812 = vsel %vm1448, %v1807, 0
      %1814 = vmatprep.subr.bf16.mxu0 0
      %1815 = vmatpush1.bf16.xpose.msra.mxu0 %v1812
      %1816 = vmatprep.subr.bf16.mxu0 0
      %1817 = vmatpush1.bf16.xpose.msra.mxu0 0
      %1818 = vmatprep.subr.bf16.mxu0 0
      %1819 = vmatpush1.bf16.xpose.msra.mxu0 0
      %1820 = vmatprep.subr.bf16.mxu0 0
      %1821 = vmatpush1.bf16.xpose.msra.mxu0 0
      %1822 = vmatprep.subr.bf16.mxu0 0
      %1823 = vmatpush1.bf16.xpose.msra.mxu0 0
      %1824 = vmatprep.subr.bf16.mxu0 0
      %1825 = vmatpush1.bf16.xpose.msra.mxu0 0
      %1826 = vmatprep.subr.bf16.mxu0 0
      %1827 = vmatpush1.bf16.xpose.msra.mxu0 0
      %1828 = vmatprep.subr.bf16.mxu0 0
      %1829 = vmatpush1.bf16.xpose.msra.mxu0 0
      %1830 = vmatprep.subr.bf16.mxu0 0
      %1831 = vmatpush1.bf16.xpose.msra.mxu0 0
      %1832 = vmatprep.subr.bf16.mxu0 0
      %1833 = vmatpush1.bf16.xpose.msra.mxu0 0
      %1834 = vmatprep.subr.bf16.mxu0 0
      %1835 = vmatpush1.bf16.xpose.msra.mxu0 0
      %1836 = vmatprep.subr.bf16.mxu0 0
      %1837 = vmatpush1.bf16.xpose.msra.mxu0 0
      %1838 = vmatprep.subr.bf16.mxu0 0
      %1839 = vmatpush1.bf16.xpose.msra.mxu0 0
      %1840 = vmatprep.subr.bf16.mxu0 0
      %1841 = vmatpush1.bf16.xpose.msra.mxu0 0
      %1842 = vmatprep.subr.bf16.mxu0 0
      %1843 = vmatpush1.bf16.xpose.msra.mxu0 0
      %1844 = vmatprep.subr.bf16.mxu0 0
      %1845 = vmatpush1.bf16.xpose.msra.mxu0 0
      %1846 = vmatprep.mubr.bf16.mxu0 0
      %1847 = vmatmul.mubr.bf16.gmra.mrb[0].mxu0 %v1809
      %v1848 = vpop.f32.mrb[0].mxu0
      %v1849 = vadd.f32 0.0, %v1848
      %v1850 = vpop.f32.mrb[0].mxu0
      %v1851 = vpop.f32.mrb[0].mxu0
      %v1852 = vpop.f32.mrb[0].mxu0
      %1853 = vdwg.mxu0
      %v1854 = vsel %vm1495, %v1849, -inf
      %1855 = vmax.xlane.f32.xlu0 %v1854
      %v1856 = vpop.xlane.xlu0 %1855
      %v1857 = vsub.f32 %v1849, %v1856
      %v1858 = vmul.f32 %v1857, 1.442695
      %v1859 = vpow.pop %v1858
      %v1860 = vsel %vm1495, %v1859, 0.0
      %1861 = vadd.xlane.f32.xlu0 %v1860
      %v1862 = vpop.xlane.xlu0 %1861
      %v1863 = vrcp.pop %v1862
      %v1864 = vmul.f32 %v1859, %v1863
      %v1865 = vpack.c.bf16 %v1864, %v1864
      %1866 = vrot.lane.b32.xlu0 %v1695, 48
      %v1867 = vpop.permute.xlu0 %1866
      %v1869 = vsel %vm1510, %v1865, 0
      %v1872 = vand.u32 %v1867, %v1517
      %1874 = vmatprep.subr.bf16.mxu0 0
      %1875 = vmatpush1.bf16.msra.mxu0 %v1872
      %1876 = vmatprep.subr.bf16.mxu0 0
      %1877 = vmatpush1.bf16.msra.mxu0 0
      %1878 = vmatprep.subr.bf16.mxu0 0
      %1879 = vmatpush1.bf16.msra.mxu0 0
      %1880 = vmatprep.subr.bf16.mxu0 0
      %1881 = vmatpush1.bf16.msra.mxu0 0
      %1882 = vmatprep.subr.bf16.mxu0 0
      %1883 = vmatpush1.bf16.msra.mxu0 0
      %1884 = vmatprep.subr.bf16.mxu0 0
      %1885 = vmatpush1.bf16.msra.mxu0 0
      %1886 = vmatprep.subr.bf16.mxu0 0
      %1887 = vmatpush1.bf16.msra.mxu0 0
      %1888 = vmatprep.subr.bf16.mxu0 0
      %1889 = vmatpush1.bf16.msra.mxu0 0
      %1890 = vmatprep.subr.bf16.mxu0 0
      %1891 = vmatpush1.bf16.msra.mxu0 0
      %1892 = vmatprep.subr.bf16.mxu0 0
      %1893 = vmatpush1.bf16.msra.mxu0 0
      %1894 = vmatprep.subr.bf16.mxu0 0
      %1895 = vmatpush1.bf16.msra.mxu0 0
      %1896 = vmatprep.subr.bf16.mxu0 0
      %1897 = vmatpush1.bf16.msra.mxu0 0
      %1898 = vmatprep.subr.bf16.mxu0 0
      %1899 = vmatpush1.bf16.msra.mxu0 0
      %1900 = vmatprep.subr.bf16.mxu0 0
      %1901 = vmatpush1.bf16.msra.mxu0 0
      %1902 = vmatprep.subr.bf16.mxu0 0
      %1903 = vmatpush1.bf16.msra.mxu0 0
      %1904 = vmatprep.subr.bf16.mxu0 0
      %1905 = vmatpush1.bf16.msra.mxu0 0
      %1906 = vmatprep.mubr.bf16.mxu0 0
      %1907 = vmatmul.mubr.bf16.gmra.mrb[0].mxu0 %v1869
      %v1908 = vpop.f32.mrb[0].mxu0
      %v1909 = vadd.f32 0.0, %v1908
      %v1910 = vpop.f32.mrb[0].mxu0
      %v1911 = vpop.f32.mrb[0].mxu0
      %v1912 = vpop.f32.mrb[0].mxu0
      %1913 = vdwg.mxu0
      %1915 = vrot.lane.b32.xlu0 %v1909, 16
      %v1916 = vpop.permute.xlu0 %1915
      %v1918 = vsel %vm1448, %v1799, %v1916
      %v1920 = vrot.slane %v1918, 3
      %vm1922 = vcmask 1044480
      %v1923 = vsel %vm1922, %v1676, %v1920
      %v1924 = vpack.c.bf16 %v1920, %v1923
      %v1925 = vld [vmem:[%s722] sm:$0xf]
      %v1926 = vld [vmem:[%s722 + $0x4] sm:$0xf]
      %v1927 = vld [vmem:[%s722 + $0x8] sm:$0xf]
      %v1928 = vld [vmem:[%s722 + $0xc] sm:$0xf]
      %v1929 = vld [vmem:[%s725] sm:$0x1]
      %v1931 = vlaneseq
      %v1932 = vshrl.u32 %v1931, 7
      %v1933 = vsub.s32 0, %v1932
      %v1934 = vrot.slane %v1929, %v1933
      %v1940 = vunpack.c.l.b16 %v1925
      %v1941 = vunpack.c.l.b16 %v1926
      %v1942 = vunpack.c.l.b16 %v1927
      %v1943 = vunpack.c.l.b16 %v1928
      %v1944 = vpack.c.b16 %v1941, %v1940
      %v1945 = vpack.c.b16 %v1943, %v1942
      %v1949 = vsel %vm1329, %v1924, 0
      %1951 = vmatprep.subr.bf16.mxu0 0
      %1952 = vmatpush1.bf16.msra.mxu0 %v1944
      %1953 = vmatprep.subr.bf16.mxu0 0
      %1954 = vmatpush1.bf16.msra.mxu0 %v1945
      %1955 = vmatprep.subr.bf16.mxu0 0
      %1956 = vmatpush1.bf16.msra.mxu0 0
      %1957 = vmatprep.subr.bf16.mxu0 0
      %1958 = vmatpush1.bf16.msra.mxu0 0
      %1959 = vmatprep.subr.bf16.mxu0 0
      %1960 = vmatpush1.bf16.msra.mxu0 0
      %1961 = vmatprep.subr.bf16.mxu0 0
      %1962 = vmatpush1.bf16.msra.mxu0 0
      %1963 = vmatprep.subr.bf16.mxu0 0
      %1964 = vmatpush1.bf16.msra.mxu0 0
      %1965 = vmatprep.subr.bf16.mxu0 0
      %1966 = vmatpush1.bf16.msra.mxu0 0
      %1967 = vmatprep.subr.bf16.mxu0 0
      %1968 = vmatpush1.bf16.msra.mxu0 0
      %1969 = vmatprep.subr.bf16.mxu0 0
      %1970 = vmatpush1.bf16.msra.mxu0 0
      %1971 = vmatprep.subr.bf16.mxu0 0
      %1972 = vmatpush1.bf16.msra.mxu0 0
      %1973 = vmatprep.subr.bf16.mxu0 0
      %1974 = vmatpush1.bf16.msra.mxu0 0
      %1975 = vmatprep.subr.bf16.mxu0 0
      %1976 = vmatpush1.bf16.msra.mxu0 0
      %1977 = vmatprep.subr.bf16.mxu0 0
      %1978 = vmatpush1.bf16.msra.mxu0 0
      %1979 = vmatprep.subr.bf16.mxu0 0
      %1980 = vmatpush1.bf16.msra.mxu0 0
      %1981 = vmatprep.subr.bf16.mxu0 0
      %1982 = vmatpush1.bf16.msra.mxu0 0
      %1983 = vmatprep.mubr.bf16.mxu0 0
      %1984 = vmatmul.mubr.bf16.gmra.mrb[0].mxu0 %v1949
      %v1985 = vpop.f32.mrb[0].mxu0
      %v1986 = vadd.f32 %v1934, %v1985
      %v1987 = vpop.f32.mrb[0].mxu0
      %v1988 = vpop.f32.mrb[0].mxu0
      %v1989 = vadd.f32 %v1934, %v1988
      %v1990 = vpop.f32.mrb[0].mxu0
      %1991 = vdwg.mxu0
      %v1992 = vadd.f32 %v1325, %v1986
      %v1993 = vadd.f32 %v1326, %v1989
      %v1994 = vld [vmem:[%s728] sm:$0x1]
      %v1995 = vld [vmem:[%s731] sm:$0x1]
      %v1996 = vsel %vm1329, %v1992, 0.0
      %1997 = vadd.xlane.f32.xlu0 %v1996
      %v1998 = vpop.xlane.xlu0 %1997
      %v1999 = vsel %vm1333, %v1993, 0.0
      %2000 = vadd.xlane.f32.xlu0 %v1999
      %v2001 = vpop.xlane.xlu0 %2000
      %v2002 = vmul.f32 %v1998, %v1337
      %v2003 = vmul.f32 %v2001, %v1337
      %v2004 = vsub.f32 %v1992, %v2002
      %v2005 = vsub.f32 %v1993, %v2003
      %v2006 = vmul.f32 %v2004, %v2004
      %v2007 = vmul.f32 %v2005, %v2005
      %v2008 = vsel %vm1329, %v2006, 0.0
      %2009 = vadd.xlane.f32.xlu0 %v2008
      %v2010 = vpop.xlane.xlu0 %2009
      %v2011 = vsel %vm1333, %v2007, 0.0
      %2012 = vadd.xlane.f32.xlu0 %v2011
      %v2013 = vpop.xlane.xlu0 %2012
      %v2014 = vmul.f32 %v2010, %v1337
      %v2015 = vmul.f32 %v2013, %v1337
      %v2016 = vadd.f32 %v2014, 1e-06
      %v2017 = vadd.f32 %v2015, 1e-06
      %v2018 = vrsqrt.pop %v2016
      %v2019 = vrsqrt.pop %v2017
      %v2020 = vmul.f32 %v2004, %v2018
      %v2021 = vmul.f32 %v2005, %v2019
      %v2023 = vlaneseq
      %v2024 = vshrl.u32 %v2023, 7
      %v2025 = vsub.s32 0, %v2024
      %v2026 = vrot.slane %v1994, %v2025
      %v2028 = vmul.f32 %v2020, %v2026
      %v2029 = vmul.f32 %v2021, %v2026
      %v2031 = vlaneseq
      %v2032 = vshrl.u32 %v2031, 7
      %v2033 = vsub.s32 0, %v2032
      %v2034 = vrot.slane %v1995, %v2033
      %v2036 = vadd.f32 %v2028, %v2034
      %v2037 = vadd.f32 %v2029, %v2034
      %v2038 = vpack.c.bf16 %v2037, %v2036
      %v2039 = vld [vmem:[%s736] sm:$0xf]
      %v2040 = vld [vmem:[%s736 + $0x4] sm:$0xf]
      %v2041 = vld [vmem:[%s736 + $0x8] sm:$0xf]
      %v2042 = vld [vmem:[%s736 + $0xc] sm:$0xf]
      %v2043 = vld [vmem:[%s739] sm:$0x1]
      %v2045 = vlaneseq
      %v2046 = vshrl.u32 %v2045, 7
      %v2047 = vsub.s32 0, %v2046
      %v2048 = vrot.slane %v2043, %v2047
      %v2054 = vunpack.c.l.b16 %v2039
      %v2055 = vunpack.c.l.b16 %v2040
      %v2056 = vunpack.c.l.b16 %v2041
      %v2057 = vunpack.c.l.b16 %v2042
      %v2058 = vpack.c.b16 %v2055, %v2054
      %v2059 = vpack.c.b16 %v2057, %v2056
      %v2063 = vsel %vm1329, %v2038, 0
      %2065 = vmatprep.subr.bf16.mxu0 0
      %2066 = vmatpush1.bf16.msra.mxu0 %v2058
      %2067 = vmatprep.subr.bf16.mxu0 0
      %2068 = vmatpush1.bf16.msra.mxu0 %v2059
      %2069 = vmatprep.subr.bf16.mxu0 0
      %2070 = vmatpush1.bf16.msra.mxu0 0
      %2071 = vmatprep.subr.bf16.mxu0 0
      %2072 = vmatpush1.bf16.msra.mxu0 0
      %2073 = vmatprep.subr.bf16.mxu0 0
      %2074 = vmatpush1.bf16.msra.mxu0 0
      %2075 = vmatprep.subr.bf16.mxu0 0
      %2076 = vmatpush1.bf16.msra.mxu0 0
      %2077 = vmatprep.subr.bf16.mxu0 0
      %2078 = vmatpush1.bf16.msra.mxu0 0
      %2079 = vmatprep.subr.bf16.mxu0 0
      %2080 = vmatpush1.bf16.msra.mxu0 0
      %2081 = vmatprep.subr.bf16.mxu0 0
      %2082 = vmatpush1.bf16.msra.mxu0 0
      %2083 = vmatprep.subr.bf16.mxu0 0
      %2084 = vmatpush1.bf16.msra.mxu0 0
      %2085 = vmatprep.subr.bf16.mxu0 0
      %2086 = vmatpush1.bf16.msra.mxu0 0
      %2087 = vmatprep.subr.bf16.mxu0 0
      %2088 = vmatpush1.bf16.msra.mxu0 0
      %2089 = vmatprep.subr.bf16.mxu0 0
      %2090 = vmatpush1.bf16.msra.mxu0 0
      %2091 = vmatprep.subr.bf16.mxu0 0
      %2092 = vmatpush1.bf16.msra.mxu0 0
      %2093 = vmatprep.subr.bf16.mxu0 0
      %2094 = vmatpush1.bf16.msra.mxu0 0
      %2095 = vmatprep.subr.bf16.mxu0 0
      %2096 = vmatpush1.bf16.msra.mxu0 0
      %2097 = vmatprep.mubr.bf16.mxu0 0
      %2098 = vmatmul.mubr.bf16.gmra.mrb[0].mxu0 %v2063
      %v2099 = vpop.f32.mrb[0].mxu0
      %v2100 = vadd.f32 %v2048, %v2099
      %v2101 = vpop.f32.mrb[0].mxu0
      %v2102 = vpop.f32.mrb[0].mxu0
      %v2103 = vadd.f32 %v2048, %v2102
      %v2104 = vpop.f32.mrb[0].mxu0
      %2105 = vdwg.mxu0
      %v2106 = vmul.f32 %v2100, 0.5
      %v2107 = vmul.f32 %v2103, 0.5
      %v2108 = vmul.f32 %v2100, 0.044715
      %v2109 = vmul.f32 %v2103, 0.044715
      %v2110 = vmul.f32 %v2108, %v2100
      %v2111 = vmul.f32 %v2109, %v2103
      %v2112 = vmul.f32 %v2110, %v2100
      %v2113 = vmul.f32 %v2111, %v2103
      %v2114 = vadd.f32 %v2100, %v2112
      %v2115 = vadd.f32 %v2103, %v2113
      %v2116 = vmul.f32 %v2114, 0.7978846
      %v2117 = vmul.f32 %v2115, 0.7978846
      %v2118 = vtanh.pop %v2116
      %v2119 = vtanh.pop %v2117
      %v2120 = vadd.f32 %v2118, 1.0
      %v2121 = vadd.f32 %v2119, 1.0
      %v2122 = vmul.f32 %v2106, %v2120
      %v2123 = vmul.f32 %v2107, %v2121
      %v2124 = vpack.c.bf16 %v2123, %v2122
      %v2125 = vld [vmem:[%s744] sm:$0xf]
      %v2126 = vld [vmem:[%s744 + $0x4] sm:$0xf]
      %v2127 = vld [vmem:[%s744 + $0x8] sm:$0xf]
      %v2128 = vld [vmem:[%s744 + $0xc] sm:$0xf]
      %v2129 = vld [vmem:[%s744 + $0x10] sm:$0xf]
      %v2130 = vld [vmem:[%s744 + $0x14] sm:$0xf]
      %v2131 = vld [vmem:[%s744 + $0x18] sm:$0xf]
      %v2132 = vld [vmem:[%s744 + $0x1c] sm:$0xf]
      %v2133 = vld [vmem:[%s744 + $0x20] sm:$0xf]
      %v2134 = vld [vmem:[%s744 + $0x24] sm:$0xf]
      %v2135 = vld [vmem:[%s744 + $0x28] sm:$0xf]
      %v2136 = vld [vmem:[%s744 + $0x2c] sm:$0xf]
      %v2137 = vld [vmem:[%s744 + $0x30] sm:$0xf]
      %v2138 = vld [vmem:[%s744 + $0x34] sm:$0xf]
      %v2139 = vld [vmem:[%s744 + $0x38] sm:$0xf]
      %v2140 = vld [vmem:[%s744 + $0x3c] sm:$0xf]
      %v2141 = vld [vmem:[%s747] sm:$0x1]
      %v2143 = vlaneseq
      %v2144 = vshrl.u32 %v2143, 7
      %v2145 = vsub.s32 0, %v2144
      %v2146 = vrot.slane %v2141, %v2145
      %v2164 = vunpack.c.l.b16 %v2125
      %v2165 = vunpack.c.l.b16 %v2126
      %v2166 = vunpack.c.l.b16 %v2127
      %v2167 = vunpack.c.l.b16 %v2128
      %v2168 = vunpack.c.l.b16 %v2129
      %v2169 = vunpack.c.l.b16 %v2130
      %v2170 = vunpack.c.l.b16 %v2131
      %v2171 = vunpack.c.l.b16 %v2132
      %v2172 = vunpack.c.l.b16 %v2133
      %v2173 = vunpack.c.l.b16 %v2134
      %v2174 = vunpack.c.l.b16 %v2135
      %v2175 = vunpack.c.l.b16 %v2136
      %v2176 = vunpack.c.l.b16 %v2137
      %v2177 = vunpack.c.l.b16 %v2138
      %v2178 = vunpack.c.l.b16 %v2139
      %v2179 = vunpack.c.l.b16 %v2140
      %v2180 = vpack.c.b16 %v2165, %v2164
      %v2181 = vpack.c.b16 %v2167, %v2166
      %v2182 = vpack.c.b16 %v2169, %v2168
      %v2183 = vpack.c.b16 %v2171, %v2170
      %v2184 = vpack.c.b16 %v2173, %v2172
      %v2185 = vpack.c.b16 %v2175, %v2174
      %v2186 = vpack.c.b16 %v2177, %v2176
      %v2187 = vpack.c.b16 %v2179, %v2178
      %2196 = vmatprep.subr.bf16.mxu0 0
      %2197 = vmatpush1.bf16.msra.mxu0 %v2180
      %2198 = vmatprep.subr.bf16.mxu0 0
      %2199 = vmatpush1.bf16.msra.mxu0 %v2181
      %2200 = vmatprep.subr.bf16.mxu0 0
      %2201 = vmatpush1.bf16.msra.mxu0 %v2182
      %2202 = vmatprep.subr.bf16.mxu0 0
      %2203 = vmatpush1.bf16.msra.mxu0 %v2183
      %2204 = vmatprep.subr.bf16.mxu0 0
      %2205 = vmatpush1.bf16.msra.mxu0 %v2184
      %2206 = vmatprep.subr.bf16.mxu0 0
      %2207 = vmatpush1.bf16.msra.mxu0 %v2185
      %2208 = vmatprep.subr.bf16.mxu0 0
      %2209 = vmatpush1.bf16.msra.mxu0 %v2186
      %2210 = vmatprep.subr.bf16.mxu0 0
      %2211 = vmatpush1.bf16.msra.mxu0 %v2187
      %2212 = vmatprep.subr.bf16.mxu0 0
      %2213 = vmatpush1.bf16.msra.mxu0 0
      %2214 = vmatprep.subr.bf16.mxu0 0
      %2215 = vmatpush1.bf16.msra.mxu0 0
      %2216 = vmatprep.subr.bf16.mxu0 0
      %2217 = vmatpush1.bf16.msra.mxu0 0
      %2218 = vmatprep.subr.bf16.mxu0 0
      %2219 = vmatpush1.bf16.msra.mxu0 0
      %2220 = vmatprep.subr.bf16.mxu0 0
      %2221 = vmatpush1.bf16.msra.mxu0 0
      %2222 = vmatprep.subr.bf16.mxu0 0
      %2223 = vmatpush1.bf16.msra.mxu0 0
      %2224 = vmatprep.subr.bf16.mxu0 0
      %2225 = vmatpush1.bf16.msra.mxu0 0
      %2226 = vmatprep.subr.bf16.mxu0 0
      %2227 = vmatpush1.bf16.msra.mxu0 0
      %2228 = vmatprep.mubr.bf16.mxu0 0
      %2229 = vmatmul.mubr.bf16.gmra.mrb[0].mxu0 %v2124
      %v2230 = vpop.f32.mrb[0].mxu0
      %v2231 = vadd.f32 %v2146, %v2230
      %v2232 = vpop.f32.mrb[0].mxu0
      %v2233 = vpop.f32.mrb[0].mxu0
      %v2234 = vadd.f32 %v2146, %v2233
      %v2235 = vpop.f32.mrb[0].mxu0
      %2236 = vdwg.mxu0
      %v2237 = vadd.f32 %v1992, %v2231
      %v2238 = vadd.f32 %v1993, %v2234
      %2239 = vst.msk [vmem:[#allocation2] sm:$0xff] %vm1329, %v2237
      %2240 = vst.msk [vmem:[#allocation2 + $0x8] sm:$0x3] %vm1333, %v2238
      %p2241 = scmp.eq.s32.totalorder %s33, 2
      // Predicated region
      $region93: #{tpu_custom_call.1} parent=87 // pred_check
        %p2242 = pneg %p2241
      $region94: #{tpu_custom_call.1} parent=87 // pred_check_branch
        %2244 = sbr.rel (%p2242) target = $region96
      $region95: #{tpu_custom_call.1} parent=87 // pred_region
        %2245 = vst.msk [vmem:[%s752] sm:$0xff] %vm1329, %v2237
        %2246 = vst.msk [vmem:[%s752 + $0x8] sm:$0x3] %vm1333, %v2238
      $region96: #{tpu_custom_call.1} parent=87 // pred_fallthru
        _
      %p2247 = scmp.eq.s32.totalorder %s33, 5
      // Predicated region
      $region97: #{tpu_custom_call.1} parent=87 // pred_check
        %p2248 = pneg %p2247
      $region98: #{tpu_custom_call.1} parent=87 // pred_check_branch
        %2250 = sbr.rel (%p2248) target = $region100
      $region99: #{tpu_custom_call.1} parent=87 // pred_region
        %s2251 = scalar_lea.vmem %s752, 16
        %2252 = vst.msk [vmem:[%s2251] sm:$0xff] %vm1329, %v2237
        %2253 = vst.msk [vmem:[%s2251 + $0x8] sm:$0x3] %vm1333, %v2238
      $region100: #{tpu_custom_call.1} parent=87 // pred_fallthru
        _
      %p2254 = scmp.eq.s32.totalorder %s33, 8
      // Predicated region
      $region101: #{tpu_custom_call.1} parent=87 // pred_check
        %p2255 = pneg %p2254
      $region102: #{tpu_custom_call.1} parent=87 // pred_check_branch
        %2257 = sbr.rel (%p2255) target = $region104
      $region103: #{tpu_custom_call.1} parent=87 // pred_region
        %s2258 = scalar_lea.vmem %s752, 32
        %2259 = vst.msk [vmem:[%s2258] sm:$0xff] %vm1329, %v2237
        %2260 = vst.msk [vmem:[%s2258 + $0x8] sm:$0x3] %vm1333, %v2238
      $region104: #{tpu_custom_call.1} parent=87 // pred_fallthru
        _
      %p2261 = scmp.eq.s32.totalorder %s33, 11
      // Predicated region
      $region105: #{tpu_custom_call.1} parent=87 // pred_check
        %p2262 = pneg %p2261
      $region106: #{tpu_custom_call.1} parent=87 // pred_check_branch
        %2264 = sbr.rel (%p2262) target = $region108
      $region107: #{tpu_custom_call.1} parent=87 // pred_region
        %s2265 = scalar_lea.vmem %s752, 48
        %2266 = vst.msk [vmem:[%s2265] sm:$0xff] %vm1329, %v2237
        %2267 = vst.msk [vmem:[%s2265 + $0x8] sm:$0x3] %vm1333, %v2238
      $region108: #{tpu_custom_call.1} parent=87 // pred_fallthru
        _
      %s2268 = smul.u32 2, %s32
      %p2269 = scmp.lt.s32.totalorder %s2268, 1
      %s2270 = scalar_select %p2269, %s2268, 1
      %s2271 = smul.addr %s2270, 8
      %s2272 = scalar_lea.vmem %s17, %s2271
      // Predicated region
      $region109: #{tpu_custom_call.1} parent=87 // pred_check
        %p2273 = pneg %p480
      $region110: #{tpu_custom_call.1} parent=87 // pred_check_branch
        %2275 = sbr.rel (%p2273) target = $region112
      $region111: #{tpu_custom_call.1} parent=87 // pred_region
        %s2276 = smul.u32 2, %s32
      $region112: #{tpu_custom_call.1} parent=87 // pred_fallthru
        _
      // Predicated region
      $region113: #{tpu_custom_call.1} parent=87 // pred_check
        %p2277 = pneg %p480
      $region114: #{tpu_custom_call.1} parent=87 // pred_check_branch
        %2279 = sbr.rel (%p2277) target = $region116
      $region115: #{tpu_custom_call.1} parent=87 // pred_region
        %s2280 = smul.u32 2, %s32
        %p2281 = scmp.lt.s32.totalorder %s2280, 1
        %s2282 = scalar_select %p2281, %s2280, 1
        %s2283 = smul.addr %s2282, 8
        %s2284 = scalar_lea.vmem %s17, %s2283
      $region116: #{tpu_custom_call.1} parent=87 // pred_fallthru
        _
    $region88: #{tpu_custom_call.1} parent=5 // pred_fallthru
      _
    %p2285 = scmp.le.s32.totalorder 2, %s23
    // Predicated region
    $region117: #{tpu_custom_call.1} parent=5 // pred_check
      %p2286 = pneg %p2285
    $region118: #{tpu_custom_call.1} parent=5 // pred_check_branch
      %2288 = sbr.rel (%p2286) target = $region120
    $region119: #{tpu_custom_call.1} parent=5 // pred_region
      %s2289 = ssub.s32 %s23, 2
    $region120: #{tpu_custom_call.1} parent=5 // pred_fallthru
      _
  $region6: #{tpu_custom_call.1} parent=0 // loop_footer
    %s27 = sadd.s32 1, %s23
  $region7: #{tpu_custom_call.1} parent=0 // loop_footer_branch
    %22 = sbr.rel target = $region3
  $region8: #{tpu_custom_call.1} parent=0 // loop_exit
    _

</llo_original>
